<compile_context>
chip_gen: v6e
topology: v6e:2x2x1
jax: 0.10.0
libtpu: 0.0.40
codegen_flags: <defaults>
</compile_context>

<pallas_src>
import jax
import jax.numpy as jnp
from jax.experimental import pallas as pl
from jax.experimental.pallas import tpu as pltpu  # noqa: F401  (TPU backend)

# ---- small, module-consistent sizes ----
B = 8      # batch
S = 8      # sequence length
D = 128    # encoder_output_size / embedding dim
L = 16     # number of labels (rows of label_matrix) == disper_num
K = 16     # disperse codebook size (emb_p)
V = 128    # vocab size (multiple of 128 -> lane-dense decoder logits)


def _full_spec(shape):
    # single-invocation (no grid) kernel: whole array as one VMEM block
    return pl.BlockSpec(shape, lambda: (0,) * len(shape))


def _vq(z, e):
    """Squared-L2 distances + nearest-code quantization (straight-through fwd).

    distances[b,c] = ||z_b||^2 - 2 z_b.e_c + ||e_c||^2
    zq_b           = e[argmin_c distances]  (first-index tie-break, torch.argmin)
    """
    f32 = jnp.float32
    z_sq = jnp.sum(z * z, axis=1, keepdims=True)            # [B, 1]
    e_sq = jnp.sum(e * e, axis=1)[None, :]                   # [1, C]
    cross = jax.lax.dot_general(z, e, (((1,), (1,)), ((), ())),
                                preferred_element_type=f32)  # [B, C]
    d = z_sq - 2.0 * cross + e_sq
    num_codes = d.shape[1]
    col = jax.lax.broadcasted_iota(jnp.int32, d.shape, 1)
    min_d = jnp.min(d, axis=1, keepdims=True)
    first = jnp.min(jnp.where(d <= min_d, col, num_codes), axis=1, keepdims=True)
    onehot = (col == first).astype(f32)
    zq = jnp.dot(onehot, e, preferred_element_type=f32)      # [B, D]
    return d, zq


# ---------------------------------------------------------------------------
# Single fused kernel: graph -> embed -> encode -> quantize(t,p) -> decode.
# ---------------------------------------------------------------------------
def fused_kernel(idx_ref, y_ref, mask_ref, maskf_ref,
                 emb_tab_ref, lm_ref, cb_p_ref,
                 adj_p_ref, adj_c_ref, wgp_ref, wgc_ref,
                 wet_ref, bet_ref, wep_ref, bep_ref, wdec_ref,
                 lm_out_ref, dist_t_ref, zq_t_ref, dist_p_ref, zq_p_ref,
                 logits_ref, cls_loss_ref, recon_loss_ref):
    f32 = jnp.float32

    # ---- (1) GraphModel propagation over the label hierarchy ----
    # out = relu(A_parent @ LM @ Wp) + relu(A_child @ LM @ Wc) + LM
    # TODO(synk): original GraphModel[config.graph_type] may be a GAT with
    # learned attention coefficients; this uses fixed normalized adjacency.
    lm = lm_ref[...]                                          # [L, D]
    hp = jnp.dot(jnp.dot(adj_p_ref[...], lm, preferred_element_type=f32),
                 wgp_ref[...], preferred_element_type=f32)
    hc = jnp.dot(jnp.dot(adj_c_ref[...], lm, preferred_element_type=f32),
                 wgc_ref[...], preferred_element_type=f32)
    label_matrix = jnp.maximum(hp, 0.0) + jnp.maximum(hc, 0.0) + lm
    lm_out_ref[...] = label_matrix

    # ---- (2) embedding lookup: token one-hot @ table on the MXU ----
    idx = idx_ref[...]                                        # [B, S] int32
    vcol = jax.lax.broadcasted_iota(jnp.int32, (B, S, V), 2)
    tok_onehot3 = (vcol == idx[:, :, None]).astype(f32)       # [B, S, V]
    tok_onehot = tok_onehot3.reshape(B * S, V)                # [B*S, V]
    emb_flat = jnp.dot(tok_onehot, emb_tab_ref[...],
                       preferred_element_type=f32)            # [B*S, D]
    emb3 = emb_flat.reshape(B, S, D)                          # [B, S, D]

    # ---- (3) encoder: masked mean pooling + two heads ----
    mask2 = mask_ref[...]                                     # [B, S]
    summed = jnp.sum(emb3 * mask2[:, :, None], axis=1)        # [B, D]
    denom = jnp.maximum(jnp.sum(mask2, axis=1, keepdims=True), 1.0)
    pooled = summed / denom
    z_t = jnp.tanh(jnp.dot(pooled, wet_ref[...], preferred_element_type=f32)
                   + bet_ref[...])                            # [B, D]
    z_p = jnp.tanh(jnp.dot(pooled, wep_ref[...], preferred_element_type=f32)
                   + bep_ref[...])                            # [B, D]

    # ---- (4) taxonomy quantizer over refined label matrix + classifier CE ----
    d_t, zq_t = _vq(z_t, label_matrix)
    dist_t_ref[...] = d_t
    zq_t_ref[...] = zq_t
    ycol = jax.lax.broadcasted_iota(jnp.int32, (B, L), 1)
    y1h = (ycol == y_ref[...]).astype(f32)                    # [B, L]
    logits_t = -d_t
    mx_t = jnp.max(logits_t, axis=1, keepdims=True)
    lse_t = mx_t + jnp.log(jnp.sum(jnp.exp(logits_t - mx_t), axis=1, keepdims=True))
    nll_t = lse_t - jnp.sum(logits_t * y1h, axis=1, keepdims=True)   # [B, 1]
    cls_loss_ref[...] = jnp.sum(nll_t, axis=0, keepdims=True) * (1.0 / B)

    # ---- (5) disperse quantizer (distance-only; no CE target) ----
    d_p, zq_p = _vq(z_p, cb_p_ref[...])
    dist_p_ref[...] = d_p
    zq_p_ref[...] = zq_p

    # ---- (6) decoder: code-conditioned token head + masked recon CE ----
    # TODO(synk): the original FixVQVAE decoder is a full transformer decoder
    # over memory=[zq_t, zq_p]; here it is a code-conditioned token-level head.
    h3 = emb3 + zq_t[:, None, :] + zq_p[:, None, :]           # [B, S, D]
    logits = jnp.dot(h3.reshape(B * S, D), wdec_ref[...],
                     preferred_element_type=f32)              # [B*S, V]
    logits_ref[...] = logits
    mx = jnp.max(logits, axis=1, keepdims=True)
    lse = mx + jnp.log(jnp.sum(jnp.exp(logits - mx), axis=1, keepdims=True))
    nll_tok = lse - jnp.sum(logits * tok_onehot, axis=1, keepdims=True)  # [B*S, 1]
    maskf = maskf_ref[...]                                    # [B*S, 1]
    num = jnp.sum(nll_tok * maskf, axis=0, keepdims=True)     # [1, 1]
    den = jnp.maximum(jnp.sum(maskf, axis=0, keepdims=True), 1.0)
    recon_loss_ref[...] = num / den


# ---------------------------------------------------------------------------
# Parameters (deterministic, in-script — synthetic, no checkpoint load)
# ---------------------------------------------------------------------------
def init_params(key):
    ks = jax.random.split(key, 8)
    sc = 0.05
    f32 = jnp.float32
    params = dict(
        emb_table=jax.random.normal(ks[0], (V, D), f32) * sc,     # emb_layer
        label_matrix=jax.random.normal(ks[1], (L, D), f32) * sc,  # label_matrix
        codebook_p=jax.random.normal(ks[2], (K, D), f32) * sc,    # emb_p codebook
        w_graph_p=jax.random.normal(ks[3], (D, D), f32) * sc,
        w_graph_c=jax.random.normal(ks[4], (D, D), f32) * sc,
        w_enc_t=jax.random.normal(ks[5], (D, D), f32) * sc,
        b_enc_t=jnp.zeros((1, D), f32),
        w_enc_p=jax.random.normal(ks[6], (D, D), f32) * sc,
        b_enc_p=jnp.zeros((1, D), f32),
        w_dec=jax.random.normal(ks[7], (D, V), f32) * sc,
    )
    # deterministic row-normalized parent/child adjacency over the label tree
    eye = jnp.eye(L, dtype=f32)
    parent = eye + jnp.roll(eye, 1, axis=1)
    child = eye + jnp.roll(eye, -1, axis=1)
    params['adj_parent'] = parent / jnp.sum(parent, axis=1, keepdims=True)
    params['adj_child'] = child / jnp.sum(child, axis=1, keepdims=True)
    return params


# ---------------------------------------------------------------------------
# Forward wrapper: one fused pallas_call, trivial post-processing only.
# ---------------------------------------------------------------------------
@jax.jit
def fix_model_forward(params, input_idx, x_pad_mask, y):
    f32 = jnp.float32
    mask = x_pad_mask.astype(f32)                 # [B, S]
    maskf = mask.reshape(B * S, 1)                # [B*S, 1]
    idx = input_idx.astype(jnp.int32)             # [B, S]
    y2 = y.astype(jnp.int32).reshape(B, 1)        # [B, 1]

    (label_matrix, dist_t, zq_t, dist_p, zq_p,
     logits_flat, cls_loss, recon) = pl.pallas_call(
        fused_kernel,
        out_shape=(
            jax.ShapeDtypeStruct((L, D), f32),        # refined label matrix
            jax.ShapeDtypeStruct((B, L), f32),        # distances_t
            jax.ShapeDtypeStruct((B, D), f32),        # zq_t
            jax.ShapeDtypeStruct((B, K), f32),        # distances_p
            jax.ShapeDtypeStruct((B, D), f32),        # zq_p
            jax.ShapeDtypeStruct((B * S, V), f32),    # decoder logits
            jax.ShapeDtypeStruct((1, 1), f32),        # classifier loss
            jax.ShapeDtypeStruct((1, 1), f32),        # recon loss
        ),
        in_specs=[
            _full_spec((B, S)),        # input_idx
            _full_spec((B, 1)),        # y
            _full_spec((B, S)),        # mask [B,S]
            _full_spec((B * S, 1)),    # mask flat
            _full_spec((V, D)),        # emb_table
            _full_spec((L, D)),        # label_matrix (raw)
            _full_spec((K, D)),        # codebook_p
            _full_spec((L, L)),        # adj_parent
            _full_spec((L, L)),        # adj_child
            _full_spec((D, D)),        # w_graph_p
            _full_spec((D, D)),        # w_graph_c
            _full_spec((D, D)),        # w_enc_t
            _full_spec((1, D)),        # b_enc_t
            _full_spec((D, D)),        # w_enc_p
            _full_spec((1, D)),        # b_enc_p
            _full_spec((D, V)),        # w_dec
        ],
        out_specs=(
            _full_spec((L, D)), _full_spec((B, L)), _full_spec((B, D)),
            _full_spec((B, K)), _full_spec((B, D)), _full_spec((B * S, V)),
            _full_spec((1, 1)), _full_spec((1, 1)),
        ),
    )(idx, y2, mask, maskf,
      params['emb_table'], params['label_matrix'], params['codebook_p'],
      params['adj_parent'], params['adj_child'],
      params['w_graph_p'], params['w_graph_c'],
      params['w_enc_t'], params['b_enc_t'],
      params['w_enc_p'], params['b_enc_p'],
      params['w_dec'])

    classifier_loss = cls_loss[0, 0]
    recon_loss = recon[0, 0]

    result = {
        'label_matrix': label_matrix,
        'quantizer_out_t': {'classifier_loss': classifier_loss,
                            'distances': dist_t,
                            'quantized': zq_t},
        'quantizer_out_p': {'distances': dist_p, 'quantized': zq_p},
        'recon_loss': recon_loss,
        'decoder_logits': logits_flat.reshape(B, S, V),
    }
    # exactly the Fix_Model.forward post-processing:
    result['classifier'] = {
        'loss': result['quantizer_out_t']['classifier_loss'],
        'prob': -result['quantizer_out_t']['distances'],
    }
    return result


if __name__ == "__main__":
    key = jax.random.PRNGKey(0)
    pkey, ikey, ykey = jax.random.split(key, 3)
    params = init_params(pkey)

    input_idx = jax.random.randint(ikey, (B, S), 0, V)                  # [B, S]
    lengths = jnp.array([S, S - 2, S, S - 1, 3, S, S, 5], jnp.int32)    # [B]
    x_pad_mask = (jnp.arange(S)[None, :] < lengths[:, None]).astype(jnp.float32)
    y = jax.random.randint(ykey, (B,), 0, L)                            # [B]

    out = fix_model_forward(params, input_idx, x_pad_mask, y)
    jax.block_until_ready(out)

    assert out['classifier']['prob'].shape == (B, L)
    assert out['quantizer_out_t']['distances'].shape == (B, L)
    assert out['quantizer_out_p']['distances'].shape == (B, K)
    assert out['decoder_logits'].shape == (B, S, V)
    assert out['label_matrix'].shape == (L, D)
    assert jnp.isfinite(out['classifier']['loss'])
    assert jnp.isfinite(out['recon_loss'])
    print("KERNEL_OK")
</pallas_src>

<mosaic_0001>
module attributes {stable_mosaic.version = 11 : i64} {
  func.func @fused_kernel(%arg0: memref<8x8xi32, #tpu.memory_space<vmem>>, %arg1: memref<8x1xi32, #tpu.memory_space<vmem>>, %arg2: memref<8x8xf32, #tpu.memory_space<vmem>>, %arg3: memref<64x1xf32, #tpu.memory_space<vmem>>, %arg4: memref<128x128xf32, #tpu.memory_space<vmem>>, %arg5: memref<16x128xf32, #tpu.memory_space<vmem>>, %arg6: memref<16x128xf32, #tpu.memory_space<vmem>>, %arg7: memref<16x16xf32, #tpu.memory_space<vmem>>, %arg8: memref<16x16xf32, #tpu.memory_space<vmem>>, %arg9: memref<128x128xf32, #tpu.memory_space<vmem>>, %arg10: memref<128x128xf32, #tpu.memory_space<vmem>>, %arg11: memref<128x128xf32, #tpu.memory_space<vmem>>, %arg12: memref<1x128xf32, #tpu.memory_space<vmem>>, %arg13: memref<128x128xf32, #tpu.memory_space<vmem>>, %arg14: memref<1x128xf32, #tpu.memory_space<vmem>>, %arg15: memref<128x128xf32, #tpu.memory_space<vmem>>, %arg16: memref<16x128xf32, #tpu.memory_space<vmem>>, %arg17: memref<8x16xf32, #tpu.memory_space<vmem>>, %arg18: memref<8x128xf32, #tpu.memory_space<vmem>>, %arg19: memref<8x16xf32, #tpu.memory_space<vmem>>, %arg20: memref<8x128xf32, #tpu.memory_space<vmem>>, %arg21: memref<64x128xf32, #tpu.memory_space<vmem>>, %arg22: memref<1x1xf32, #tpu.memory_space<vmem>>, %arg23: memref<1x1xf32, #tpu.memory_space<vmem>>) attributes {dimension_semantics = [], scalar_prefetch = 0 : i64, scratch_operands = 0 : i64, tpu.core_type = #tpu.core_type<tc>} {
    %c0 = arith.constant 0 : index
    %c0_0 = arith.constant 0 : index
    %0 = vector.load %arg5[%c0, %c0_0] : memref<16x128xf32, #tpu.memory_space<vmem>>, vector<16x128xf32>
    %c0_1 = arith.constant 0 : index
    %c0_2 = arith.constant 0 : index
    %1 = vector.load %arg7[%c0_1, %c0_2] : memref<16x16xf32, #tpu.memory_space<vmem>>, vector<16x16xf32>
    %cst = arith.constant dense<0.000000e+00> : vector<16x128xf32>
    %2 = tpu.matmul %1, %0, %cst {dimension_numbers = #tpu.dot_dimension_numbers<[1], [0], [0], [1], [0, 0, 1, 1], [], []>} : vector<16x16xf32>, vector<16x128xf32>, vector<16x128xf32> -> vector<16x128xf32>
    %c0_3 = arith.constant 0 : index
    %c0_4 = arith.constant 0 : index
    %3 = vector.load %arg9[%c0_3, %c0_4] : memref<128x128xf32, #tpu.memory_space<vmem>>, vector<128x128xf32>
    %cst_5 = arith.constant dense<0.000000e+00> : vector<16x128xf32>
    %4 = tpu.matmul %2, %3, %cst_5 {dimension_numbers = #tpu.dot_dimension_numbers<[1], [0], [0], [1], [0, 0, 1, 1], [], []>} : vector<16x128xf32>, vector<128x128xf32>, vector<16x128xf32> -> vector<16x128xf32>
    %c0_6 = arith.constant 0 : index
    %c0_7 = arith.constant 0 : index
    %5 = vector.load %arg8[%c0_6, %c0_7] : memref<16x16xf32, #tpu.memory_space<vmem>>, vector<16x16xf32>
    %cst_8 = arith.constant dense<0.000000e+00> : vector<16x128xf32>
    %6 = tpu.matmul %5, %0, %cst_8 {dimension_numbers = #tpu.dot_dimension_numbers<[1], [0], [0], [1], [0, 0, 1, 1], [], []>} : vector<16x16xf32>, vector<16x128xf32>, vector<16x128xf32> -> vector<16x128xf32>
    %c0_9 = arith.constant 0 : index
    %c0_10 = arith.constant 0 : index
    %7 = vector.load %arg10[%c0_9, %c0_10] : memref<128x128xf32, #tpu.memory_space<vmem>>, vector<128x128xf32>
    %cst_11 = arith.constant dense<0.000000e+00> : vector<16x128xf32>
    %8 = tpu.matmul %6, %7, %cst_11 {dimension_numbers = #tpu.dot_dimension_numbers<[1], [0], [0], [1], [0, 0, 1, 1], [], []>} : vector<16x128xf32>, vector<128x128xf32>, vector<16x128xf32> -> vector<16x128xf32>
    %cst_12 = arith.constant 0.000000e+00 : f32
    %9 = vector.broadcast %cst_12 : f32 to vector<16x128xf32>
    %10 = arith.maximumf %4, %9 : vector<16x128xf32>
    %cst_13 = arith.constant 0.000000e+00 : f32
    %11 = vector.broadcast %cst_13 : f32 to vector<16x128xf32>
    %12 = arith.maximumf %8, %11 : vector<16x128xf32>
    %13 = arith.addf %10, %12 : vector<16x128xf32>
    %14 = arith.addf %13, %0 : vector<16x128xf32>
    %c0_14 = arith.constant 0 : index
    %c0_15 = arith.constant 0 : index
    %15 = vector.load %arg16[%c0_14, %c0_15] : memref<16x128xf32, #tpu.memory_space<vmem>>, vector<16x128xf32>
    tpu.vector_store %arg16[%c0_14, %c0_15], %14 {strides = array<i32>} : memref<16x128xf32, #tpu.memory_space<vmem>>, vector<16x128xf32>,
    %c0_16 = arith.constant 0 : index
    %c0_17 = arith.constant 0 : index
    %16 = vector.load %arg0[%c0_16, %c0_17] : memref<8x8xi32, #tpu.memory_space<vmem>>, vector<8x8xi32>
    %17 = tpu.iota {dimensions = array<i32: 2>} : vector<8x8x128xi32>
    %18 = vector.shape_cast %16 : vector<8x8xi32> to vector<8x8x1xi32>
    %19 = vector.broadcast %18 : vector<8x8x1xi32> to vector<8x8x128xi32>
    %20 = arith.cmpi eq, %17, %19 : vector<8x8x128xi32>
    %21 = arith.extui %20 : vector<8x8x128xi1> to vector<8x8x128xi32>
    %22 = arith.sitofp %21 : vector<8x8x128xi32> to vector<8x8x128xf32>
    %23 = vector.shape_cast %22 : vector<8x8x128xf32> to vector<64x128xf32>
    %c0_18 = arith.constant 0 : index
    %c0_19 = arith.constant 0 : index
    %24 = vector.load %arg4[%c0_18, %c0_19] : memref<128x128xf32, #tpu.memory_space<vmem>>, vector<128x128xf32>
    %cst_20 = arith.constant dense<0.000000e+00> : vector<64x128xf32>
    %25 = tpu.matmul %23, %24, %cst_20 {dimension_numbers = #tpu.dot_dimension_numbers<[1], [0], [0], [1], [0, 0, 1, 1], [], []>} : vector<64x128xf32>, vector<128x128xf32>, vector<64x128xf32> -> vector<64x128xf32>
    %26 = vector.shape_cast %25 : vector<64x128xf32> to vector<8x8x128xf32>
    %c0_21 = arith.constant 0 : index
    %c0_22 = arith.constant 0 : index
    %27 = vector.load %arg2[%c0_21, %c0_22] : memref<8x8xf32, #tpu.memory_space<vmem>>, vector<8x8xf32>
    %28 = vector.shape_cast %27 : vector<8x8xf32> to vector<8x8x1xf32>
    %29 = vector.broadcast %28 : vector<8x8x1xf32> to vector<8x8x128xf32>
    %30 = arith.mulf %26, %29 : vector<8x8x128xf32>
    %cst_23 = arith.constant dense<0.000000e+00> : vector<8x128xf32>
    %31 = vector.multi_reduction <add>, %30, %cst_23 [1] : vector<8x8x128xf32> to vector<8x128xf32>
    %cst_24 = arith.constant dense<0.000000e+00> : vector<8xf32>
    %32 = vector.multi_reduction <add>, %27, %cst_24 [1] : vector<8x8xf32> to vector<8xf32>
    %33 = vector.shape_cast %32 : vector<8xf32> to vector<8x1xf32>
    %cst_25 = arith.constant 1.000000e+00 : f32
    %34 = vector.broadcast %cst_25 : f32 to vector<8x1xf32>
    %35 = arith.maximumf %33, %34 : vector<8x1xf32>
    %36 = vector.broadcast %35 : vector<8x1xf32> to vector<8x128xf32>
    %37 = arith.divf %31, %36 : vector<8x128xf32>
    %c0_26 = arith.constant 0 : index
    %c0_27 = arith.constant 0 : index
    %38 = vector.load %arg11[%c0_26, %c0_27] : memref<128x128xf32, #tpu.memory_space<vmem>>, vector<128x128xf32>
    %cst_28 = arith.constant dense<0.000000e+00> : vector<8x128xf32>
    %39 = tpu.matmul %37, %38, %cst_28 {dimension_numbers = #tpu.dot_dimension_numbers<[1], [0], [0], [1], [0, 0, 1, 1], [], []>} : vector<8x128xf32>, vector<128x128xf32>, vector<8x128xf32> -> vector<8x128xf32>
    %c0_29 = arith.constant 0 : index
    %c0_30 = arith.constant 0 : index
    %40 = vector.load %arg12[%c0_29, %c0_30] : memref<1x128xf32, #tpu.memory_space<vmem>>, vector<1x128xf32>
    %41 = vector.broadcast %40 : vector<1x128xf32> to vector<8x128xf32>
    %42 = arith.addf %39, %41 : vector<8x128xf32>
    %43 = math.tanh %42 : vector<8x128xf32>
    %c0_31 = arith.constant 0 : index
    %c0_32 = arith.constant 0 : index
    %44 = vector.load %arg13[%c0_31, %c0_32] : memref<128x128xf32, #tpu.memory_space<vmem>>, vector<128x128xf32>
    %cst_33 = arith.constant dense<0.000000e+00> : vector<8x128xf32>
    %45 = tpu.matmul %37, %44, %cst_33 {dimension_numbers = #tpu.dot_dimension_numbers<[1], [0], [0], [1], [0, 0, 1, 1], [], []>} : vector<8x128xf32>, vector<128x128xf32>, vector<8x128xf32> -> vector<8x128xf32>
    %c0_34 = arith.constant 0 : index
    %c0_35 = arith.constant 0 : index
    %46 = vector.load %arg14[%c0_34, %c0_35] : memref<1x128xf32, #tpu.memory_space<vmem>>, vector<1x128xf32>
    %47 = vector.broadcast %46 : vector<1x128xf32> to vector<8x128xf32>
    %48 = arith.addf %45, %47 : vector<8x128xf32>
    %49 = math.tanh %48 : vector<8x128xf32>
    %50 = arith.mulf %43, %43 : vector<8x128xf32>
    %cst_36 = arith.constant dense<0.000000e+00> : vector<8xf32>
    %51 = vector.multi_reduction <add>, %50, %cst_36 [1] : vector<8x128xf32> to vector<8xf32>
    %52 = vector.shape_cast %51 : vector<8xf32> to vector<8x1xf32>
    %53 = arith.mulf %14, %14 : vector<16x128xf32>
    %cst_37 = arith.constant dense<0.000000e+00> : vector<16xf32>
    %54 = vector.multi_reduction <add>, %53, %cst_37 [1] : vector<16x128xf32> to vector<16xf32>
    %55 = vector.shape_cast %54 : vector<16xf32> to vector<1x16xf32>
    %cst_38 = arith.constant dense<0.000000e+00> : vector<8x16xf32>
    %56 = tpu.matmul %43, %14, %cst_38 {dimension_numbers = #tpu.dot_dimension_numbers<[1], [1], [0], [0], [0, 0, 1, 0], [], []>} : vector<8x128xf32>, vector<16x128xf32>, vector<8x16xf32> -> vector<8x16xf32>
    %cst_39 = arith.constant 2.000000e+00 : f32
    %57 = vector.broadcast %cst_39 : f32 to vector<8x16xf32>
    %58 = arith.mulf %57, %56 : vector<8x16xf32>
    %59 = vector.broadcast %52 : vector<8x1xf32> to vector<8x16xf32>
    %60 = arith.subf %59, %58 : vector<8x16xf32>
    %61 = vector.broadcast %55 : vector<1x16xf32> to vector<8x16xf32>
    %62 = arith.addf %60, %61 : vector<8x16xf32>
    %63 = tpu.iota {dimensions = array<i32: 1>} : vector<8x16xi32>
    %cst_40 = arith.constant dense<0x7F800000> : vector<8xf32>
    %64 = vector.multi_reduction <minimumf>, %62, %cst_40 [1] : vector<8x16xf32> to vector<8xf32>
    %65 = vector.shape_cast %64 : vector<8xf32> to vector<8x1xf32>
    %66 = vector.broadcast %65 : vector<8x1xf32> to vector<8x16xf32>
    %67 = arith.cmpf ole, %62, %66 : vector<8x16xf32>
    %c16_i32 = arith.constant 16 : i32
    %68 = vector.broadcast %c16_i32 : i32 to vector<8x16xi32>
    %69 = arith.select %67, %63, %68 : vector<8x16xi1>, vector<8x16xi32>
    %cst_41 = arith.constant dense<2147483647> : vector<8xi32>
    %70 = vector.multi_reduction <minsi>, %69, %cst_41 [1] : vector<8x16xi32> to vector<8xi32>
    %71 = vector.shape_cast %70 : vector<8xi32> to vector<8x1xi32>
    %72 = vector.broadcast %71 : vector<8x1xi32> to vector<8x16xi32>
    %73 = arith.cmpi eq, %63, %72 : vector<8x16xi32>
    %74 = arith.extui %73 : vector<8x16xi1> to vector<8x16xi32>
    %75 = arith.sitofp %74 : vector<8x16xi32> to vector<8x16xf32>
    %cst_42 = arith.constant dense<0.000000e+00> : vector<8x128xf32>
    %76 = tpu.matmul %75, %14, %cst_42 {dimension_numbers = #tpu.dot_dimension_numbers<[1], [0], [0], [1], [0, 0, 1, 1], [], []>} : vector<8x16xf32>, vector<16x128xf32>, vector<8x128xf32> -> vector<8x128xf32>
    %c0_43 = arith.constant 0 : index
    %c0_44 = arith.constant 0 : index
    %77 = vector.load %arg17[%c0_43, %c0_44] : memref<8x16xf32, #tpu.memory_space<vmem>>, vector<8x16xf32>
    tpu.vector_store %arg17[%c0_43, %c0_44], %62 {strides = array<i32>} : memref<8x16xf32, #tpu.memory_space<vmem>>, vector<8x16xf32>,
    %c0_45 = arith.constant 0 : index
    %c0_46 = arith.constant 0 : index
    %78 = vector.load %arg18[%c0_45, %c0_46] : memref<8x128xf32, #tpu.memory_space<vmem>>, vector<8x128xf32>
    tpu.vector_store %arg18[%c0_45, %c0_46], %76 {strides = array<i32>} : memref<8x128xf32, #tpu.memory_space<vmem>>, vector<8x128xf32>,
    %79 = tpu.iota {dimensions = array<i32: 1>} : vector<8x16xi32>
    %c0_47 = arith.constant 0 : index
    %c0_48 = arith.constant 0 : index
    %80 = vector.load %arg1[%c0_47, %c0_48] : memref<8x1xi32, #tpu.memory_space<vmem>>, vector<8x1xi32>
    %81 = vector.broadcast %80 : vector<8x1xi32> to vector<8x16xi32>
    %82 = arith.cmpi eq, %79, %81 : vector<8x16xi32>
    %83 = arith.extui %82 : vector<8x16xi1> to vector<8x16xi32>
    %84 = arith.sitofp %83 : vector<8x16xi32> to vector<8x16xf32>
    %cst_49 = arith.constant 0.000000e+00 : f32
    %85 = vector.broadcast %cst_49 : f32 to vector<8x16xf32>
    %86 = arith.subf %85, %62 : vector<8x16xf32>
    %cst_50 = arith.constant dense<0xFF800000> : vector<8xf32>
    %87 = vector.multi_reduction <maximumf>, %86, %cst_50 [1] : vector<8x16xf32> to vector<8xf32>
    %88 = vector.shape_cast %87 : vector<8xf32> to vector<8x1xf32>
    %89 = vector.broadcast %88 : vector<8x1xf32> to vector<8x16xf32>
    %90 = arith.subf %86, %89 : vector<8x16xf32>
    %91 = math.exp %90 : vector<8x16xf32>
    %cst_51 = arith.constant dense<0.000000e+00> : vector<8xf32>
    %92 = vector.multi_reduction <add>, %91, %cst_51 [1] : vector<8x16xf32> to vector<8xf32>
    %93 = vector.shape_cast %92 : vector<8xf32> to vector<8x1xf32>
    %94 = math.log %93 : vector<8x1xf32>
    %95 = arith.addf %88, %94 : vector<8x1xf32>
    %96 = arith.mulf %86, %84 : vector<8x16xf32>
    %cst_52 = arith.constant dense<0.000000e+00> : vector<8xf32>
    %97 = vector.multi_reduction <add>, %96, %cst_52 [1] : vector<8x16xf32> to vector<8xf32>
    %98 = vector.shape_cast %97 : vector<8xf32> to vector<8x1xf32>
    %99 = arith.subf %95, %98 : vector<8x1xf32>
    %cst_53 = arith.constant dense<0.000000e+00> : vector<1xf32>
    %100 = vector.multi_reduction <add>, %99, %cst_53 [0] : vector<8x1xf32> to vector<1xf32>
    %101 = vector.shape_cast %100 : vector<1xf32> to vector<1x1xf32>
    %cst_54 = arith.constant 1.250000e-01 : f32
    %102 = vector.broadcast %cst_54 : f32 to vector<1x1xf32>
    %103 = arith.mulf %101, %102 : vector<1x1xf32>
    %c0_55 = arith.constant 0 : index
    %c0_56 = arith.constant 0 : index
    %104 = vector.load %arg22[%c0_55, %c0_56] : memref<1x1xf32, #tpu.memory_space<vmem>>, vector<1x1xf32>
    tpu.vector_store %arg22[%c0_55, %c0_56], %103 {strides = array<i32>} : memref<1x1xf32, #tpu.memory_space<vmem>>, vector<1x1xf32>,
    %c0_57 = arith.constant 0 : index
    %c0_58 = arith.constant 0 : index
    %105 = vector.load %arg6[%c0_57, %c0_58] : memref<16x128xf32, #tpu.memory_space<vmem>>, vector<16x128xf32>
    %106 = arith.mulf %49, %49 : vector<8x128xf32>
    %cst_59 = arith.constant dense<0.000000e+00> : vector<8xf32>
    %107 = vector.multi_reduction <add>, %106, %cst_59 [1] : vector<8x128xf32> to vector<8xf32>
    %108 = vector.shape_cast %107 : vector<8xf32> to vector<8x1xf32>
    %109 = arith.mulf %105, %105 : vector<16x128xf32>
    %cst_60 = arith.constant dense<0.000000e+00> : vector<16xf32>
    %110 = vector.multi_reduction <add>, %109, %cst_60 [1] : vector<16x128xf32> to vector<16xf32>
    %111 = vector.shape_cast %110 : vector<16xf32> to vector<1x16xf32>
    %cst_61 = arith.constant dense<0.000000e+00> : vector<8x16xf32>
    %112 = tpu.matmul %49, %105, %cst_61 {dimension_numbers = #tpu.dot_dimension_numbers<[1], [1], [0], [0], [0, 0, 1, 0], [], []>} : vector<8x128xf32>, vector<16x128xf32>, vector<8x16xf32> -> vector<8x16xf32>
    %cst_62 = arith.constant 2.000000e+00 : f32
    %113 = vector.broadcast %cst_62 : f32 to vector<8x16xf32>
    %114 = arith.mulf %113, %112 : vector<8x16xf32>
    %115 = vector.broadcast %108 : vector<8x1xf32> to vector<8x16xf32>
    %116 = arith.subf %115, %114 : vector<8x16xf32>
    %117 = vector.broadcast %111 : vector<1x16xf32> to vector<8x16xf32>
    %118 = arith.addf %116, %117 : vector<8x16xf32>
    %119 = tpu.iota {dimensions = array<i32: 1>} : vector<8x16xi32>
    %cst_63 = arith.constant dense<0x7F800000> : vector<8xf32>
    %120 = vector.multi_reduction <minimumf>, %118, %cst_63 [1] : vector<8x16xf32> to vector<8xf32>
    %121 = vector.shape_cast %120 : vector<8xf32> to vector<8x1xf32>
    %122 = vector.broadcast %121 : vector<8x1xf32> to vector<8x16xf32>
    %123 = arith.cmpf ole, %118, %122 : vector<8x16xf32>
    %c16_i32_64 = arith.constant 16 : i32
    %124 = vector.broadcast %c16_i32_64 : i32 to vector<8x16xi32>
    %125 = arith.select %123, %119, %124 : vector<8x16xi1>, vector<8x16xi32>
    %cst_65 = arith.constant dense<2147483647> : vector<8xi32>
    %126 = vector.multi_reduction <minsi>, %125, %cst_65 [1] : vector<8x16xi32> to vector<8xi32>
    %127 = vector.shape_cast %126 : vector<8xi32> to vector<8x1xi32>
    %128 = vector.broadcast %127 : vector<8x1xi32> to vector<8x16xi32>
    %129 = arith.cmpi eq, %119, %128 : vector<8x16xi32>
    %130 = arith.extui %129 : vector<8x16xi1> to vector<8x16xi32>
    %131 = arith.sitofp %130 : vector<8x16xi32> to vector<8x16xf32>
    %cst_66 = arith.constant dense<0.000000e+00> : vector<8x128xf32>
    %132 = tpu.matmul %131, %105, %cst_66 {dimension_numbers = #tpu.dot_dimension_numbers<[1], [0], [0], [1], [0, 0, 1, 1], [], []>} : vector<8x16xf32>, vector<16x128xf32>, vector<8x128xf32> -> vector<8x128xf32>
    %c0_67 = arith.constant 0 : index
    %c0_68 = arith.constant 0 : index
    %133 = vector.load %arg19[%c0_67, %c0_68] : memref<8x16xf32, #tpu.memory_space<vmem>>, vector<8x16xf32>
    tpu.vector_store %arg19[%c0_67, %c0_68], %118 {strides = array<i32>} : memref<8x16xf32, #tpu.memory_space<vmem>>, vector<8x16xf32>,
    %c0_69 = arith.constant 0 : index
    %c0_70 = arith.constant 0 : index
    %134 = vector.load %arg20[%c0_69, %c0_70] : memref<8x128xf32, #tpu.memory_space<vmem>>, vector<8x128xf32>
    tpu.vector_store %arg20[%c0_69, %c0_70], %132 {strides = array<i32>} : memref<8x128xf32, #tpu.memory_space<vmem>>, vector<8x128xf32>,
    %135 = vector.shape_cast %76 : vector<8x128xf32> to vector<8x1x128xf32>
    %136 = vector.broadcast %135 : vector<8x1x128xf32> to vector<8x8x128xf32>
    %137 = arith.addf %26, %136 : vector<8x8x128xf32>
    %138 = vector.shape_cast %132 : vector<8x128xf32> to vector<8x1x128xf32>
    %139 = vector.broadcast %138 : vector<8x1x128xf32> to vector<8x8x128xf32>
    %140 = arith.addf %137, %139 : vector<8x8x128xf32>
    %141 = vector.shape_cast %140 : vector<8x8x128xf32> to vector<64x128xf32>
    %c0_71 = arith.constant 0 : index
    %c0_72 = arith.constant 0 : index
    %142 = vector.load %arg15[%c0_71, %c0_72] : memref<128x128xf32, #tpu.memory_space<vmem>>, vector<128x128xf32>
    %cst_73 = arith.constant dense<0.000000e+00> : vector<64x128xf32>
    %143 = tpu.matmul %141, %142, %cst_73 {dimension_numbers = #tpu.dot_dimension_numbers<[1], [0], [0], [1], [0, 0, 1, 1], [], []>} : vector<64x128xf32>, vector<128x128xf32>, vector<64x128xf32> -> vector<64x128xf32>
    %c0_74 = arith.constant 0 : index
    %c0_75 = arith.constant 0 : index
    %144 = vector.load %arg21[%c0_74, %c0_75] : memref<64x128xf32, #tpu.memory_space<vmem>>, vector<64x128xf32>
    tpu.vector_store %arg21[%c0_74, %c0_75], %143 {strides = array<i32>} : memref<64x128xf32, #tpu.memory_space<vmem>>, vector<64x128xf32>,
    %cst_76 = arith.constant dense<0xFF800000> : vector<64xf32>
    %145 = vector.multi_reduction <maximumf>, %143, %cst_76 [1] : vector<64x128xf32> to vector<64xf32>
    %146 = vector.shape_cast %145 : vector<64xf32> to vector<64x1xf32>
    %147 = vector.broadcast %146 : vector<64x1xf32> to vector<64x128xf32>
    %148 = arith.subf %143, %147 : vector<64x128xf32>
    %149 = math.exp %148 : vector<64x128xf32>
    %cst_77 = arith.constant dense<0.000000e+00> : vector<64xf32>
    %150 = vector.multi_reduction <add>, %149, %cst_77 [1] : vector<64x128xf32> to vector<64xf32>
    %151 = vector.shape_cast %150 : vector<64xf32> to vector<64x1xf32>
    %152 = math.log %151 : vector<64x1xf32>
    %153 = arith.addf %146, %152 : vector<64x1xf32>
    %154 = arith.mulf %143, %23 : vector<64x128xf32>
    %cst_78 = arith.constant dense<0.000000e+00> : vector<64xf32>
    %155 = vector.multi_reduction <add>, %154, %cst_78 [1] : vector<64x128xf32> to vector<64xf32>
    %156 = vector.shape_cast %155 : vector<64xf32> to vector<64x1xf32>
    %157 = arith.subf %153, %156 : vector<64x1xf32>
    %c0_79 = arith.constant 0 : index
    %c0_80 = arith.constant 0 : index
    %158 = vector.load %arg3[%c0_79, %c0_80] : memref<64x1xf32, #tpu.memory_space<vmem>>, vector<64x1xf32>
    %159 = arith.mulf %157, %158 : vector<64x1xf32>
    %cst_81 = arith.constant dense<0.000000e+00> : vector<1xf32>
    %160 = vector.multi_reduction <add>, %159, %cst_81 [0] : vector<64x1xf32> to vector<1xf32>
    %161 = vector.shape_cast %160 : vector<1xf32> to vector<1x1xf32>
    %cst_82 = arith.constant dense<0.000000e+00> : vector<1xf32>
    %162 = vector.multi_reduction <add>, %158, %cst_82 [0] : vector<64x1xf32> to vector<1xf32>
    %163 = vector.shape_cast %162 : vector<1xf32> to vector<1x1xf32>
    %cst_83 = arith.constant 1.000000e+00 : f32
    %164 = vector.broadcast %cst_83 : f32 to vector<1x1xf32>
    %165 = arith.maximumf %163, %164 : vector<1x1xf32>
    %166 = arith.divf %161, %165 : vector<1x1xf32>
    %c0_84 = arith.constant 0 : index
    %c0_85 = arith.constant 0 : index
    %167 = vector.load %arg23[%c0_84, %c0_85] : memref<1x1xf32, #tpu.memory_space<vmem>>, vector<1x1xf32>
    tpu.vector_store %arg23[%c0_84, %c0_85], %166 {strides = array<i32>} : memref<1x1xf32, #tpu.memory_space<vmem>>, vector<1x1xf32>,
    return
  }
}

</mosaic_0001>

<llo_original>
// kernel: neg.1
$region0: #{neg.1}
  #allocation2 [shape = 's32[1]{0}', space=sflag, size = 0x4, scoped, tag = 'scoped memory for neg.1']
  %s0 = inlined_call_operand.vmem [shape: f32[8,16], index: 0, kind: input, shape index: {}]
  %s1 = inlined_call_operand.hbm [shape: f32[8,16], index: 1, kind: output, shape index: {}]
  $region1: #{neg.1} parent=0
    #allocation0 [shape = 'u8[4096]{0}', space=vmem, size = 0x1000, scoped, tag = 'operand span for operand 1']
    #allocation1 [shape = 's32[1]{0}', space=sflag, size = 0x4, scoped, tag = 'scoped memory for neg.1']
    %2 = vsyncpa [#allocation1], 0
    %v3 = vld [vmem:[%s0] sm:$0xff]
    %4 = xla_tuple %v3
    %5 = xla_tuple %4
    %v6 = vxor.u32 %v3, 2147483648
    %7 = xla_tuple %v6
    %8 = vst [vmem:[#allocation0] sm:$0xff] %v6
    %s10 = ssub.s32 128, 128
    %11 = vsyncadd [#allocation1], %s10
    %s13 = sshll.u32 [#allocation0], 4
    %s14 = int_to_ptr.vmem [resolvable:$true] %s13
    %16 = dma.vmem_to_hbm [thread:$0]  %s14, 128, %s1, [#allocation1]
    %17 = dma.done [#allocation1], 128
    %18 = vsyncpa [#allocation1], 1

// kernel: fix_model_forward.1
$region0: #{fix_model_forward.1}
  #allocation0 [shape = 'u32[]', space=smem, size = 0x4, offset = 0x4, fixed_abs, tag = 'smem constant byte address 0x4 - core index']
  #allocation1 [shape = 'u32[144,128]{1,0:T(1,128)}', space=vmem, size = 0x12000, scoped, tag = 'internal scratch']
  %s0 = inlined_call_operand.vmem [shape: s32[8,8], index: 0, kind: input, shape index: {}]
  %s1 = inlined_call_operand.vmem [shape: s32[8,1], index: 1, kind: input, shape index: {}]
  %s2 = inlined_call_operand.vmem [shape: f32[8,8], index: 2, kind: input, shape index: {}]
  %s3 = inlined_call_operand.vmem [shape: f32[64,1], index: 3, kind: input, shape index: {}]
  %s4 = inlined_call_operand.hbm [shape: f32[128,128], index: 4, kind: input, shape index: {}]
  %s5 = inlined_call_operand.vmem [shape: f32[16,128], index: 5, kind: input, shape index: {}]
  %s6 = inlined_call_operand.vmem [shape: f32[16,128], index: 6, kind: input, shape index: {}]
  %s7 = inlined_call_operand.vmem [shape: f32[16,16], index: 7, kind: input, shape index: {}]
  %s8 = inlined_call_operand.vmem [shape: f32[16,16], index: 8, kind: input, shape index: {}]
  %s9 = inlined_call_operand.hbm [shape: f32[128,128], index: 9, kind: input, shape index: {}]
  %s10 = inlined_call_operand.hbm [shape: f32[128,128], index: 10, kind: input, shape index: {}]
  %s11 = inlined_call_operand.hbm [shape: f32[128,128], index: 11, kind: input, shape index: {}]
  %s12 = inlined_call_operand.vmem [shape: f32[1,128], index: 12, kind: input, shape index: {}]
  %s13 = inlined_call_operand.hbm [shape: f32[128,128], index: 13, kind: input, shape index: {}]
  %s14 = inlined_call_operand.vmem [shape: f32[1,128], index: 14, kind: input, shape index: {}]
  %s15 = inlined_call_operand.hbm [shape: f32[128,128], index: 15, kind: input, shape index: {}]
  %s16 = inlined_call_operand.hbm [shape: f32[16,128], index: 16, kind: output, shape index: {0}]
  %s17 = inlined_call_operand.vmem [shape: f32[8,16], index: 17, kind: output, shape index: {1}]
  %s18 = inlined_call_operand.hbm [shape: f32[8,128], index: 18, kind: output, shape index: {2}]
  %s19 = inlined_call_operand.hbm [shape: f32[8,16], index: 19, kind: output, shape index: {3}]
  %s20 = inlined_call_operand.hbm [shape: f32[8,128], index: 20, kind: output, shape index: {4}]
  %s21 = inlined_call_operand.hbm [shape: f32[64,128], index: 21, kind: output, shape index: {5}]
  %s22 = inlined_call_operand.hbm [shape: f32[1,1], index: 22, kind: output, shape index: {6}]
  %s23 = inlined_call_operand.hbm [shape: f32[1,1], index: 23, kind: output, shape index: {7}]
  %24 = xla_tuple %s16, %s17, %s18, %s19, %s20, %s21, %s22, %s23
  %s25 = sld [smem:[#allocation0]]
  $region154: #{fix_model_forward.1} parent=0
    _
  %s27 = ssub.s32 1, %s25
  %s28 = scalar_select 0, %s27, %s25
  $region1: #{fix_model_forward.1} parent=0
    #allocation2 [shape = 'u8[65536]{0}', space=vmem, size = 0x10000, scoped, tag = 'input window, operand 4, single buffered']
    #allocation3 [shape = 's32[1]{0}', space=sflag, size = 0x4, scoped, tag = 'scoped memory for fix_model_forward.1']
    #allocation4 [shape = 's32[1]{0}', space=sflag, size = 0x4, scoped, tag = 'scoped memory for fix_model_forward.1']
    #allocation5 [shape = 'u8[65536]{0}', space=vmem, size = 0x10000, scoped, tag = 'input window, operand 9, single buffered']
    #allocation6 [shape = 's32[1]{0}', space=sflag, size = 0x4, scoped, tag = 'scoped memory for fix_model_forward.1']
    #allocation7 [shape = 'u8[65536]{0}', space=vmem, size = 0x10000, scoped, tag = 'input window, operand 10, single buffered']
    #allocation8 [shape = 'u8[65536]{0}', space=vmem, size = 0x10000, scoped, tag = 'input window, operand 11, single buffered']
    #allocation9 [shape = 's32[1]{0}', space=sflag, size = 0x4, scoped, tag = 'scoped memory for fix_model_forward.1']
    #allocation10 [shape = 'u8[65536]{0}', space=vmem, size = 0x10000, scoped, tag = 'input window, operand 13, single buffered']
    #allocation11 [shape = 'u8[65536]{0}', space=vmem, size = 0x10000, scoped, tag = 'input window, operand 15, single buffered']
    #allocation12 [shape = 's32[1]{0}', space=sflag, size = 0x4, scoped, tag = 'scoped memory for fix_model_forward.1']
    #allocation13 [shape = 'u8[8192]{0}', space=vmem, size = 0x2000, scoped, tag = 'output window, operand 0, single buffered']
    #allocation14 [shape = 'u8[4096]{0}', space=vmem, size = 0x1000, scoped, tag = 'output window, operand 2, single buffered']
    #allocation15 [shape = 's32[1]{0}', space=sflag, size = 0x4, scoped, tag = 'scoped memory for fix_model_forward.1']
    #allocation16 [shape = 'u8[4096]{0}', space=vmem, size = 0x1000, scoped, tag = 'output window, operand 3, single buffered']
    #allocation17 [shape = 'u8[4096]{0}', space=vmem, size = 0x1000, scoped, tag = 'output window, operand 4, single buffered']
    #allocation18 [shape = 's32[1]{0}', space=sflag, size = 0x4, scoped, tag = 'scoped memory for fix_model_forward.1']
    #allocation19 [shape = 'u8[32768]{0}', space=vmem, size = 0x8000, scoped, tag = 'output window, operand 5, single buffered']
    #allocation20 [shape = 'u8[512]{0}', space=vmem, size = 0x400, scoped, tag = 'output window, operand 6, single buffered']
    #allocation21 [shape = 's32[1]{0}', space=sflag, size = 0x4, scoped, tag = 'scoped memory for fix_model_forward.1']
    #allocation22 [shape = 'u8[512]{0}', space=vmem, size = 0x400, scoped, tag = 'output window, operand 7, single buffered']
    %29 = vsyncpa [#allocation3], 0
    %30 = vsyncpa [#allocation6], 0
    %31 = vsyncpa [#allocation9], 0
    %32 = vsyncpa [#allocation12], 0
    %33 = vsyncpa [#allocation4], 0
    %34 = vsyncpa [#allocation15], 0
    %35 = vsyncpa [#allocation18], 0
    %36 = vsyncpa [#allocation21], 0
    // Predicated region
    $region2: #{fix_model_forward.1} parent=1 // pred_check
      _
    $region3: #{fix_model_forward.1} parent=1 // pred_check_branch
      %38 = sbr.rel (0) target = $region5
    $region4: #{fix_model_forward.1} parent=1 // pred_region
      _
    $region5: #{fix_model_forward.1} parent=1 // pred_fallthru
      _
    // Predicated region
    $region6: #{fix_model_forward.1} parent=1 // pred_check
      _
    $region7: #{fix_model_forward.1} parent=1 // pred_check_branch
      %40 = sbr.rel (0) target = $region9
    $region8: #{fix_model_forward.1} parent=1 // pred_region
      _
    $region9: #{fix_model_forward.1} parent=1 // pred_fallthru
      _
    // Predicated region
    $region10: #{fix_model_forward.1} parent=1 // pred_check
      _
    $region11: #{fix_model_forward.1} parent=1 // pred_check_branch
      %42 = sbr.rel (0) target = $region13
    $region12: #{fix_model_forward.1} parent=1 // pred_region
      _
    $region13: #{fix_model_forward.1} parent=1 // pred_fallthru
      _
    // Predicated region
    $region14: #{fix_model_forward.1} parent=1 // pred_check
      _
    $region15: #{fix_model_forward.1} parent=1 // pred_check_branch
      %44 = sbr.rel (0) target = $region17
    $region16: #{fix_model_forward.1} parent=1 // pred_region
      _
    $region17: #{fix_model_forward.1} parent=1 // pred_fallthru
      _
    // Predicated region
    $region18: #{fix_model_forward.1} parent=1 // pred_check
      _
    $region19: #{fix_model_forward.1} parent=1 // pred_check_branch
      %46 = sbr.rel (0) target = $region21
    $region20: #{fix_model_forward.1} parent=1 // pred_region
      %s48 = ssub.s32 2048, 2048
      %49 = vsyncadd [#allocation3], %s48
      %s50 = sshll.u32 [#allocation2], 4
      %s51 = int_to_ptr.vmem [resolvable:$true] %s50
      %56 = dma.hbm_to_vmem [thread:$0]  %s4, 2048, %s51, [#allocation3], 128, 128, 8
    $region21: #{fix_model_forward.1} parent=1 // pred_fallthru
      _
    // Predicated region
    $region22: #{fix_model_forward.1} parent=1 // pred_check
      _
    $region23: #{fix_model_forward.1} parent=1 // pred_check_branch
      %58 = sbr.rel (0) target = $region25
    $region24: #{fix_model_forward.1} parent=1 // pred_region
      _
    $region25: #{fix_model_forward.1} parent=1 // pred_fallthru
      _
    // Predicated region
    $region26: #{fix_model_forward.1} parent=1 // pred_check
      _
    $region27: #{fix_model_forward.1} parent=1 // pred_check_branch
      %60 = sbr.rel (0) target = $region29
    $region28: #{fix_model_forward.1} parent=1 // pred_region
      _
    $region29: #{fix_model_forward.1} parent=1 // pred_fallthru
      _
    // Predicated region
    $region30: #{fix_model_forward.1} parent=1 // pred_check
      _
    $region31: #{fix_model_forward.1} parent=1 // pred_check_branch
      %62 = sbr.rel (0) target = $region33
    $region32: #{fix_model_forward.1} parent=1 // pred_region
      _
    $region33: #{fix_model_forward.1} parent=1 // pred_fallthru
      _
    // Predicated region
    $region34: #{fix_model_forward.1} parent=1 // pred_check
      _
    $region35: #{fix_model_forward.1} parent=1 // pred_check_branch
      %64 = sbr.rel (0) target = $region37
    $region36: #{fix_model_forward.1} parent=1 // pred_region
      _
    $region37: #{fix_model_forward.1} parent=1 // pred_fallthru
      _
    // Predicated region
    $region38: #{fix_model_forward.1} parent=1 // pred_check
      _
    $region39: #{fix_model_forward.1} parent=1 // pred_check_branch
      %66 = sbr.rel (0) target = $region41
    $region40: #{fix_model_forward.1} parent=1 // pred_region
      %s68 = ssub.s32 2048, 2048
      %69 = vsyncadd [#allocation6], %s68
      %s70 = sshll.u32 [#allocation5], 4
      %s71 = int_to_ptr.vmem [resolvable:$true] %s70
      %76 = dma.hbm_to_vmem [thread:$0]  %s9, 2048, %s71, [#allocation6], 128, 128, 8
    $region41: #{fix_model_forward.1} parent=1 // pred_fallthru
      _
    // Predicated region
    $region42: #{fix_model_forward.1} parent=1 // pred_check
      _
    $region43: #{fix_model_forward.1} parent=1 // pred_check_branch
      %78 = sbr.rel (0) target = $region45
    $region44: #{fix_model_forward.1} parent=1 // pred_region
      %s80 = ssub.s32 2048, 2048
      %81 = vsyncadd [#allocation6], %s80
      %s82 = sshll.u32 [#allocation7], 4
      %s83 = int_to_ptr.vmem [resolvable:$true] %s82
      %88 = dma.hbm_to_vmem [thread:$0]  %s10, 2048, %s83, [#allocation6], 128, 128, 8
    $region45: #{fix_model_forward.1} parent=1 // pred_fallthru
      _
    // Predicated region
    $region46: #{fix_model_forward.1} parent=1 // pred_check
      _
    $region47: #{fix_model_forward.1} parent=1 // pred_check_branch
      %90 = sbr.rel (0) target = $region49
    $region48: #{fix_model_forward.1} parent=1 // pred_region
      %s92 = ssub.s32 2048, 2048
      %93 = vsyncadd [#allocation9], %s92
      %s94 = sshll.u32 [#allocation8], 4
      %s95 = int_to_ptr.vmem [resolvable:$true] %s94
      %100 = dma.hbm_to_vmem [thread:$0]  %s11, 2048, %s95, [#allocation9], 128, 128, 8
    $region49: #{fix_model_forward.1} parent=1 // pred_fallthru
      _
    // Predicated region
    $region50: #{fix_model_forward.1} parent=1 // pred_check
      _
    $region51: #{fix_model_forward.1} parent=1 // pred_check_branch
      %102 = sbr.rel (0) target = $region53
    $region52: #{fix_model_forward.1} parent=1 // pred_region
      _
    $region53: #{fix_model_forward.1} parent=1 // pred_fallthru
      _
    // Predicated region
    $region54: #{fix_model_forward.1} parent=1 // pred_check
      _
    $region55: #{fix_model_forward.1} parent=1 // pred_check_branch
      %104 = sbr.rel (0) target = $region57
    $region56: #{fix_model_forward.1} parent=1 // pred_region
      %s106 = ssub.s32 2048, 2048
      %107 = vsyncadd [#allocation9], %s106
      %s108 = sshll.u32 [#allocation10], 4
      %s109 = int_to_ptr.vmem [resolvable:$true] %s108
      %114 = dma.hbm_to_vmem [thread:$0]  %s13, 2048, %s109, [#allocation9], 128, 128, 8
    $region57: #{fix_model_forward.1} parent=1 // pred_fallthru
      _
    // Predicated region
    $region58: #{fix_model_forward.1} parent=1 // pred_check
      _
    $region59: #{fix_model_forward.1} parent=1 // pred_check_branch
      %116 = sbr.rel (0) target = $region61
    $region60: #{fix_model_forward.1} parent=1 // pred_region
      _
    $region61: #{fix_model_forward.1} parent=1 // pred_fallthru
      _
    // Predicated region
    $region62: #{fix_model_forward.1} parent=1 // pred_check
      _
    $region63: #{fix_model_forward.1} parent=1 // pred_check_branch
      %118 = sbr.rel (0) target = $region65
    $region64: #{fix_model_forward.1} parent=1 // pred_region
      %s120 = ssub.s32 2048, 2048
      %121 = vsyncadd [#allocation12], %s120
      %s122 = sshll.u32 [#allocation11], 4
      %s123 = int_to_ptr.vmem [resolvable:$true] %s122
      %128 = dma.hbm_to_vmem [thread:$0]  %s15, 2048, %s123, [#allocation12], 128, 128, 8
    $region65: #{fix_model_forward.1} parent=1 // pred_fallthru
      _
    // Predicated region
    $region66: #{fix_model_forward.1} parent=1 // pred_check
      _
    $region67: #{fix_model_forward.1} parent=1 // pred_check_branch
      %130 = sbr.rel (0) target = $region69
    $region68: #{fix_model_forward.1} parent=1 // pred_region
      %131 = dma.done [#allocation3], 2048
    $region69: #{fix_model_forward.1} parent=1 // pred_fallthru
      _
    // Predicated region
    $region70: #{fix_model_forward.1} parent=1 // pred_check
      _
    $region71: #{fix_model_forward.1} parent=1 // pred_check_branch
      %133 = sbr.rel (0) target = $region73
    $region72: #{fix_model_forward.1} parent=1 // pred_region
      %134 = dma.done [#allocation6], 2048
    $region73: #{fix_model_forward.1} parent=1 // pred_fallthru
      _
    // Predicated region
    $region74: #{fix_model_forward.1} parent=1 // pred_check
      _
    $region75: #{fix_model_forward.1} parent=1 // pred_check_branch
      %136 = sbr.rel (0) target = $region77
    $region76: #{fix_model_forward.1} parent=1 // pred_region
      %137 = dma.done [#allocation6], 2048
    $region77: #{fix_model_forward.1} parent=1 // pred_fallthru
      _
    // Predicated region
    $region78: #{fix_model_forward.1} parent=1 // pred_check
      _
    $region79: #{fix_model_forward.1} parent=1 // pred_check_branch
      %139 = sbr.rel (0) target = $region81
    $region80: #{fix_model_forward.1} parent=1 // pred_region
      %140 = dma.done [#allocation9], 2048
    $region81: #{fix_model_forward.1} parent=1 // pred_fallthru
      _
    // Predicated region
    $region82: #{fix_model_forward.1} parent=1 // pred_check
      _
    $region83: #{fix_model_forward.1} parent=1 // pred_check_branch
      %142 = sbr.rel (0) target = $region85
    $region84: #{fix_model_forward.1} parent=1 // pred_region
      %143 = dma.done [#allocation9], 2048
    $region85: #{fix_model_forward.1} parent=1 // pred_fallthru
      _
    // Predicated region
    $region86: #{fix_model_forward.1} parent=1 // pred_check
      _
    $region87: #{fix_model_forward.1} parent=1 // pred_check_branch
      %145 = sbr.rel (0) target = $region89
    $region88: #{fix_model_forward.1} parent=1 // pred_region
      %146 = dma.done [#allocation12], 2048
    $region89: #{fix_model_forward.1} parent=1 // pred_fallthru
      _
    %v147 = vld [vmem:[%s5] sm:$0xff]
    %v148 = vld [vmem:[%s5 + $0x8] sm:$0xff]
    %v149 = vld [vmem:[%s7] sm:$0xff]
    %v150 = vld [vmem:[%s7 + $0x8] sm:$0xff]
    %vm151 = vcmask 130048
    %v153 = vsel %vm151, %v149, 0
    %v156 = vsel %vm151, %v150, 0
    %158 = vmatprep.subr.mxu0 0.0
    %159 = vmatpush1.msra.mxu0 0.0
    %160 = vmatprep.subr.mxu0 0.0
    %161 = vmatpush1.msra.mxu0 0.0
    %162 = vmatprep.subr.mxu0 0.0
    %163 = vmatpush1.msra.mxu0 0.0
    %164 = vmatprep.subr.mxu0 0.0
    %165 = vmatpush1.msra.mxu0 0.0
    %166 = vmatprep.subr.mxu0 0.0
    %167 = vmatpush1.msra.mxu0 0.0
    %168 = vmatprep.subr.mxu0 0.0
    %169 = vmatpush1.msra.mxu0 0.0
    %170 = vmatprep.subr.mxu0 0.0
    %171 = vmatpush1.msra.mxu0 0.0
    %172 = vmatprep.subr.mxu0 0.0
    %173 = vmatpush1.msra.mxu0 0.0
    %174 = vmatprep.subr.mxu0 0.0
    %175 = vmatpush1.msra.mxu0 0.0
    %176 = vmatprep.subr.mxu0 0.0
    %177 = vmatpush1.msra.mxu0 0.0
    %178 = vmatprep.subr.mxu0 0.0
    %179 = vmatpush1.msra.mxu0 0.0
    %180 = vmatprep.subr.mxu0 0.0
    %181 = vmatpush1.msra.mxu0 0.0
    %182 = vmatprep.subr.mxu0 0.0
    %183 = vmatpush1.msra.mxu0 0.0
    %184 = vmatprep.subr.mxu0 0.0
    %185 = vmatpush1.msra.mxu0 0.0
    %186 = vmatprep.subr.mxu0 0.0
    %187 = vmatpush1.msra.mxu0 %v148
    %188 = vmatprep.subr.mxu0 0.0
    %189 = vmatpush1.msra.mxu0 %v147
    %190 = vmatprep.subr.mxu0 0.0
    %191 = vmatpush2.msra.mxu0 0.0
    %192 = vmatprep.subr.mxu0 0.0
    %193 = vmatpush2.msra.mxu0 0.0
    %194 = vmatprep.subr.mxu0 0.0
    %195 = vmatpush2.msra.mxu0 0.0
    %196 = vmatprep.subr.mxu0 0.0
    %197 = vmatpush2.msra.mxu0 0.0
    %198 = vmatprep.subr.mxu0 0.0
    %199 = vmatpush2.msra.mxu0 0.0
    %200 = vmatprep.subr.mxu0 0.0
    %201 = vmatpush2.msra.mxu0 0.0
    %202 = vmatprep.subr.mxu0 0.0
    %203 = vmatpush2.msra.mxu0 0.0
    %204 = vmatprep.subr.mxu0 0.0
    %205 = vmatpush2.msra.mxu0 0.0
    %206 = vmatprep.subr.mxu0 0.0
    %207 = vmatpush2.msra.mxu0 0.0
    %208 = vmatprep.subr.mxu0 0.0
    %209 = vmatpush2.msra.mxu0 0.0
    %210 = vmatprep.subr.mxu0 0.0
    %211 = vmatpush2.msra.mxu0 0.0
    %212 = vmatprep.subr.mxu0 0.0
    %213 = vmatpush2.msra.mxu0 0.0
    %214 = vmatprep.subr.mxu0 0.0
    %215 = vmatpush2.msra.mxu0 0.0
    %216 = vmatprep.subr.mxu0 0.0
    %217 = vmatpush2.msra.mxu0 0.0
    %218 = vmatprep.subr.mxu0 0.0
    %219 = vmatpush2.msra.mxu0 0.0
    %220 = vmatprep.subr.mxu0 0.0
    %221 = vmatpush2.msra.mxu0 0.0
    %222 = vmatprep.mubr.f32.mxu0 0.0
    %223 = vmatmul.mubr.f32.gmra.mxu0 %v153
    %v224 = vpop.f32.mrf.mxu0
    %v225 = vadd.f32 0.0, %v224
    %v226 = vpop.f32.mrf.mxu0
    %227 = vmatprep.mubr.f32.mxu0 0.0
    %228 = vmatmul.mubr.f32.gmra.mxu0 %v156
    %v229 = vpop.f32.mrf.mxu0
    %v230 = vadd.f32 0.0, %v229
    %v231 = vpop.f32.mrf.mxu0
    %232 = vdwg.mxu0
    %v233 = vld [vmem:[#allocation5] sm:$0xff]
    %v234 = vld [vmem:[#allocation5 + $0x8] sm:$0xff]
    %v235 = vld [vmem:[#allocation5 + $0x10] sm:$0xff]
    %v236 = vld [vmem:[#allocation5 + $0x18] sm:$0xff]
    %v237 = vld [vmem:[#allocation5 + $0x20] sm:$0xff]
    %v238 = vld [vmem:[#allocation5 + $0x28] sm:$0xff]
    %v239 = vld [vmem:[#allocation5 + $0x30] sm:$0xff]
    %v240 = vld [vmem:[#allocation5 + $0x38] sm:$0xff]
    %v241 = vld [vmem:[#allocation5 + $0x40] sm:$0xff]
    %v242 = vld [vmem:[#allocation5 + $0x48] sm:$0xff]
    %v243 = vld [vmem:[#allocation5 + $0x50] sm:$0xff]
    %v244 = vld [vmem:[#allocation5 + $0x58] sm:$0xff]
    %v245 = vld [vmem:[#allocation5 + $0x60] sm:$0xff]
    %v246 = vld [vmem:[#allocation5 + $0x68] sm:$0xff]
    %v247 = vld [vmem:[#allocation5 + $0x70] sm:$0xff]
    %v248 = vld [vmem:[#allocation5 + $0x78] sm:$0xff]
    %249 = vmatprep.subr.mxu0 0.0
    %250 = vmatpush1.msra.mxu0 %v248
    %251 = vmatprep.subr.mxu0 0.0
    %252 = vmatpush1.msra.mxu0 %v247
    %253 = vmatprep.subr.mxu0 0.0
    %254 = vmatpush1.msra.mxu0 %v246
    %255 = vmatprep.subr.mxu0 0.0
    %256 = vmatpush1.msra.mxu0 %v245
    %257 = vmatprep.subr.mxu0 0.0
    %258 = vmatpush1.msra.mxu0 %v244
    %259 = vmatprep.subr.mxu0 0.0
    %260 = vmatpush1.msra.mxu0 %v243
    %261 = vmatprep.subr.mxu0 0.0
    %262 = vmatpush1.msra.mxu0 %v242
    %263 = vmatprep.subr.mxu0 0.0
    %264 = vmatpush1.msra.mxu0 %v241
    %265 = vmatprep.subr.mxu0 0.0
    %266 = vmatpush1.msra.mxu0 %v240
    %267 = vmatprep.subr.mxu0 0.0
    %268 = vmatpush1.msra.mxu0 %v239
    %269 = vmatprep.subr.mxu0 0.0
    %270 = vmatpush1.msra.mxu0 %v238
    %271 = vmatprep.subr.mxu0 0.0
    %272 = vmatpush1.msra.mxu0 %v237
    %273 = vmatprep.subr.mxu0 0.0
    %274 = vmatpush1.msra.mxu0 %v236
    %275 = vmatprep.subr.mxu0 0.0
    %276 = vmatpush1.msra.mxu0 %v235
    %277 = vmatprep.subr.mxu0 0.0
    %278 = vmatpush1.msra.mxu0 %v234
    %279 = vmatprep.subr.mxu0 0.0
    %280 = vmatpush1.msra.mxu0 %v233
    %281 = vmatprep.subr.mxu0 0.0
    %282 = vmatpush2.msra.mxu0 0.0
    %283 = vmatprep.subr.mxu0 0.0
    %284 = vmatpush2.msra.mxu0 0.0
    %285 = vmatprep.subr.mxu0 0.0
    %286 = vmatpush2.msra.mxu0 0.0
    %287 = vmatprep.subr.mxu0 0.0
    %288 = vmatpush2.msra.mxu0 0.0
    %289 = vmatprep.subr.mxu0 0.0
    %290 = vmatpush2.msra.mxu0 0.0
    %291 = vmatprep.subr.mxu0 0.0
    %292 = vmatpush2.msra.mxu0 0.0
    %293 = vmatprep.subr.mxu0 0.0
    %294 = vmatpush2.msra.mxu0 0.0
    %295 = vmatprep.subr.mxu0 0.0
    %296 = vmatpush2.msra.mxu0 0.0
    %297 = vmatprep.subr.mxu0 0.0
    %298 = vmatpush2.msra.mxu0 0.0
    %299 = vmatprep.subr.mxu0 0.0
    %300 = vmatpush2.msra.mxu0 0.0
    %301 = vmatprep.subr.mxu0 0.0
    %302 = vmatpush2.msra.mxu0 0.0
    %303 = vmatprep.subr.mxu0 0.0
    %304 = vmatpush2.msra.mxu0 0.0
    %305 = vmatprep.subr.mxu0 0.0
    %306 = vmatpush2.msra.mxu0 0.0
    %307 = vmatprep.subr.mxu0 0.0
    %308 = vmatpush2.msra.mxu0 0.0
    %309 = vmatprep.subr.mxu0 0.0
    %310 = vmatpush2.msra.mxu0 0.0
    %311 = vmatprep.subr.mxu0 0.0
    %312 = vmatpush2.msra.mxu0 0.0
    %313 = vmatprep.mubr.f32.mxu0 0.0
    %314 = vmatmul.mubr.f32.gmra.mxu0 %v225
    %v315 = vpop.f32.mrf.mxu0
    %v316 = vadd.f32 0.0, %v315
    %v317 = vpop.f32.mrf.mxu0
    %318 = vmatprep.mubr.f32.mxu0 0.0
    %319 = vmatmul.mubr.f32.gmra.mxu0 %v230
    %v320 = vpop.f32.mrf.mxu0
    %v321 = vadd.f32 0.0, %v320
    %v322 = vpop.f32.mrf.mxu0
    %323 = vdwg.mxu0
    %v324 = vld [vmem:[%s8] sm:$0xff]
    %v325 = vld [vmem:[%s8 + $0x8] sm:$0xff]
    %v327 = vsel %vm151, %v324, 0
    %v330 = vsel %vm151, %v325, 0
    %332 = vmatprep.subr.mxu0 0.0
    %333 = vmatpush1.msra.mxu0 0.0
    %334 = vmatprep.subr.mxu0 0.0
    %335 = vmatpush1.msra.mxu0 0.0
    %336 = vmatprep.subr.mxu0 0.0
    %337 = vmatpush1.msra.mxu0 0.0
    %338 = vmatprep.subr.mxu0 0.0
    %339 = vmatpush1.msra.mxu0 0.0
    %340 = vmatprep.subr.mxu0 0.0
    %341 = vmatpush1.msra.mxu0 0.0
    %342 = vmatprep.subr.mxu0 0.0
    %343 = vmatpush1.msra.mxu0 0.0
    %344 = vmatprep.subr.mxu0 0.0
    %345 = vmatpush1.msra.mxu0 0.0
    %346 = vmatprep.subr.mxu0 0.0
    %347 = vmatpush1.msra.mxu0 0.0
    %348 = vmatprep.subr.mxu0 0.0
    %349 = vmatpush1.msra.mxu0 0.0
    %350 = vmatprep.subr.mxu0 0.0
    %351 = vmatpush1.msra.mxu0 0.0
    %352 = vmatprep.subr.mxu0 0.0
    %353 = vmatpush1.msra.mxu0 0.0
    %354 = vmatprep.subr.mxu0 0.0
    %355 = vmatpush1.msra.mxu0 0.0
    %356 = vmatprep.subr.mxu0 0.0
    %357 = vmatpush1.msra.mxu0 0.0
    %358 = vmatprep.subr.mxu0 0.0
    %359 = vmatpush1.msra.mxu0 0.0
    %360 = vmatprep.subr.mxu0 0.0
    %361 = vmatpush1.msra.mxu0 %v148
    %362 = vmatprep.subr.mxu0 0.0
    %363 = vmatpush1.msra.mxu0 %v147
    %364 = vmatprep.subr.mxu0 0.0
    %365 = vmatpush2.msra.mxu0 0.0
    %366 = vmatprep.subr.mxu0 0.0
    %367 = vmatpush2.msra.mxu0 0.0
    %368 = vmatprep.subr.mxu0 0.0
    %369 = vmatpush2.msra.mxu0 0.0
    %370 = vmatprep.subr.mxu0 0.0
    %371 = vmatpush2.msra.mxu0 0.0
    %372 = vmatprep.subr.mxu0 0.0
    %373 = vmatpush2.msra.mxu0 0.0
    %374 = vmatprep.subr.mxu0 0.0
    %375 = vmatpush2.msra.mxu0 0.0
    %376 = vmatprep.subr.mxu0 0.0
    %377 = vmatpush2.msra.mxu0 0.0
    %378 = vmatprep.subr.mxu0 0.0
    %379 = vmatpush2.msra.mxu0 0.0
    %380 = vmatprep.subr.mxu0 0.0
    %381 = vmatpush2.msra.mxu0 0.0
    %382 = vmatprep.subr.mxu0 0.0
    %383 = vmatpush2.msra.mxu0 0.0
    %384 = vmatprep.subr.mxu0 0.0
    %385 = vmatpush2.msra.mxu0 0.0
    %386 = vmatprep.subr.mxu0 0.0
    %387 = vmatpush2.msra.mxu0 0.0
    %388 = vmatprep.subr.mxu0 0.0
    %389 = vmatpush2.msra.mxu0 0.0
    %390 = vmatprep.subr.mxu0 0.0
    %391 = vmatpush2.msra.mxu0 0.0
    %392 = vmatprep.subr.mxu0 0.0
    %393 = vmatpush2.msra.mxu0 0.0
    %394 = vmatprep.subr.mxu0 0.0
    %395 = vmatpush2.msra.mxu0 0.0
    %396 = vmatprep.mubr.f32.mxu0 0.0
    %397 = vmatmul.mubr.f32.gmra.mxu0 %v327
    %v398 = vpop.f32.mrf.mxu0
    %v399 = vadd.f32 0.0, %v398
    %v400 = vpop.f32.mrf.mxu0
    %401 = vmatprep.mubr.f32.mxu0 0.0
    %402 = vmatmul.mubr.f32.gmra.mxu0 %v330
    %v403 = vpop.f32.mrf.mxu0
    %v404 = vadd.f32 0.0, %v403
    %v405 = vpop.f32.mrf.mxu0
    %406 = vdwg.mxu0
    %v407 = vld [vmem:[#allocation7] sm:$0xff]
    %v408 = vld [vmem:[#allocation7 + $0x8] sm:$0xff]
    %v409 = vld [vmem:[#allocation7 + $0x10] sm:$0xff]
    %v410 = vld [vmem:[#allocation7 + $0x18] sm:$0xff]
    %v411 = vld [vmem:[#allocation7 + $0x20] sm:$0xff]
    %v412 = vld [vmem:[#allocation7 + $0x28] sm:$0xff]
    %v413 = vld [vmem:[#allocation7 + $0x30] sm:$0xff]
    %v414 = vld [vmem:[#allocation7 + $0x38] sm:$0xff]
    %v415 = vld [vmem:[#allocation7 + $0x40] sm:$0xff]
    %v416 = vld [vmem:[#allocation7 + $0x48] sm:$0xff]
    %v417 = vld [vmem:[#allocation7 + $0x50] sm:$0xff]
    %v418 = vld [vmem:[#allocation7 + $0x58] sm:$0xff]
    %v419 = vld [vmem:[#allocation7 + $0x60] sm:$0xff]
    %v420 = vld [vmem:[#allocation7 + $0x68] sm:$0xff]
    %v421 = vld [vmem:[#allocation7 + $0x70] sm:$0xff]
    %v422 = vld [vmem:[#allocation7 + $0x78] sm:$0xff]
    %423 = vmatprep.subr.mxu0 0.0
    %424 = vmatpush1.msra.mxu0 %v422
    %425 = vmatprep.subr.mxu0 0.0
    %426 = vmatpush1.msra.mxu0 %v421
    %427 = vmatprep.subr.mxu0 0.0
    %428 = vmatpush1.msra.mxu0 %v420
    %429 = vmatprep.subr.mxu0 0.0
    %430 = vmatpush1.msra.mxu0 %v419
    %431 = vmatprep.subr.mxu0 0.0
    %432 = vmatpush1.msra.mxu0 %v418
    %433 = vmatprep.subr.mxu0 0.0
    %434 = vmatpush1.msra.mxu0 %v417
    %435 = vmatprep.subr.mxu0 0.0
    %436 = vmatpush1.msra.mxu0 %v416
    %437 = vmatprep.subr.mxu0 0.0
    %438 = vmatpush1.msra.mxu0 %v415
    %439 = vmatprep.subr.mxu0 0.0
    %440 = vmatpush1.msra.mxu0 %v414
    %441 = vmatprep.subr.mxu0 0.0
    %442 = vmatpush1.msra.mxu0 %v413
    %443 = vmatprep.subr.mxu0 0.0
    %444 = vmatpush1.msra.mxu0 %v412
    %445 = vmatprep.subr.mxu0 0.0
    %446 = vmatpush1.msra.mxu0 %v411
    %447 = vmatprep.subr.mxu0 0.0
    %448 = vmatpush1.msra.mxu0 %v410
    %449 = vmatprep.subr.mxu0 0.0
    %450 = vmatpush1.msra.mxu0 %v409
    %451 = vmatprep.subr.mxu0 0.0
    %452 = vmatpush1.msra.mxu0 %v408
    %453 = vmatprep.subr.mxu0 0.0
    %454 = vmatpush1.msra.mxu0 %v407
    %455 = vmatprep.subr.mxu0 0.0
    %456 = vmatpush2.msra.mxu0 0.0
    %457 = vmatprep.subr.mxu0 0.0
    %458 = vmatpush2.msra.mxu0 0.0
    %459 = vmatprep.subr.mxu0 0.0
    %460 = vmatpush2.msra.mxu0 0.0
    %461 = vmatprep.subr.mxu0 0.0
    %462 = vmatpush2.msra.mxu0 0.0
    %463 = vmatprep.subr.mxu0 0.0
    %464 = vmatpush2.msra.mxu0 0.0
    %465 = vmatprep.subr.mxu0 0.0
    %466 = vmatpush2.msra.mxu0 0.0
    %467 = vmatprep.subr.mxu0 0.0
    %468 = vmatpush2.msra.mxu0 0.0
    %469 = vmatprep.subr.mxu0 0.0
    %470 = vmatpush2.msra.mxu0 0.0
    %471 = vmatprep.subr.mxu0 0.0
    %472 = vmatpush2.msra.mxu0 0.0
    %473 = vmatprep.subr.mxu0 0.0
    %474 = vmatpush2.msra.mxu0 0.0
    %475 = vmatprep.subr.mxu0 0.0
    %476 = vmatpush2.msra.mxu0 0.0
    %477 = vmatprep.subr.mxu0 0.0
    %478 = vmatpush2.msra.mxu0 0.0
    %479 = vmatprep.subr.mxu0 0.0
    %480 = vmatpush2.msra.mxu0 0.0
    %481 = vmatprep.subr.mxu0 0.0
    %482 = vmatpush2.msra.mxu0 0.0
    %483 = vmatprep.subr.mxu0 0.0
    %484 = vmatpush2.msra.mxu0 0.0
    %485 = vmatprep.subr.mxu0 0.0
    %486 = vmatpush2.msra.mxu0 0.0
    %487 = vmatprep.mubr.f32.mxu0 0.0
    %488 = vmatmul.mubr.f32.gmra.mxu0 %v399
    %v489 = vpop.f32.mrf.mxu0
    %v490 = vadd.f32 0.0, %v489
    %v491 = vpop.f32.mrf.mxu0
    %492 = vmatprep.mubr.f32.mxu0 0.0
    %493 = vmatmul.mubr.f32.gmra.mxu0 %v404
    %v494 = vpop.f32.mrf.mxu0
    %v495 = vadd.f32 0.0, %v494
    %v496 = vpop.f32.mrf.mxu0
    %497 = vdwg.mxu0
    %v498 = vmax.f32 %v316, 0.0
    %v499 = vmax.f32 %v321, 0.0
    %v500 = vmax.f32 %v490, 0.0
    %v501 = vmax.f32 %v495, 0.0
    %v502 = vadd.f32 %v498, %v500
    %v503 = vadd.f32 %v499, %v501
    %v504 = vadd.f32 %v502, %v147
    %v505 = vadd.f32 %v503, %v148
    %506 = vst [vmem:[#allocation13] sm:$0xff] %v504
    %507 = vst [vmem:[#allocation13 + $0x8] sm:$0xff] %v505
    %v508 = vld [vmem:[%s0] sm:$0xff]
    %v509 = vlaneseq
    %v510 = vand.u32 %v509, 127
    %v511 = vlaneseq
    %v512 = vshrl.u32 %v511, 7
    %v513 = vsub.s32 0, %v512
    %v514 = vrot.slane %v508, %v513
    %516 = vbcast.lane.b32.xlu0 %v514, 256
    %v517 = vpop.permute.xlu0 %516
    %v518 = vlaneseq
    %v519 = vshrl.u32 %v518, 7
    %v520 = vsub.s32 1, %v519
    %v521 = vrot.slane %v508, %v520
    %523 = vbcast.lane.b32.xlu0 %v521, 256
    %v524 = vpop.permute.xlu0 %523
    %v525 = vlaneseq
    %v526 = vshrl.u32 %v525, 7
    %v527 = vsub.s32 2, %v526
    %v528 = vrot.slane %v508, %v527
    %530 = vbcast.lane.b32.xlu0 %v528, 256
    %v531 = vpop.permute.xlu0 %530
    %v532 = vlaneseq
    %v533 = vshrl.u32 %v532, 7
    %v534 = vsub.s32 3, %v533
    %v535 = vrot.slane %v508, %v534
    %537 = vbcast.lane.b32.xlu0 %v535, 256
    %v538 = vpop.permute.xlu0 %537
    %v539 = vlaneseq
    %v540 = vshrl.u32 %v539, 7
    %v541 = vsub.s32 4, %v540
    %v542 = vrot.slane %v508, %v541
    %544 = vbcast.lane.b32.xlu0 %v542, 256
    %v545 = vpop.permute.xlu0 %544
    %v546 = vlaneseq
    %v547 = vshrl.u32 %v546, 7
    %v548 = vsub.s32 5, %v547
    %v549 = vrot.slane %v508, %v548
    %551 = vbcast.lane.b32.xlu0 %v549, 256
    %v552 = vpop.permute.xlu0 %551
    %v553 = vlaneseq
    %v554 = vshrl.u32 %v553, 7
    %v555 = vsub.s32 6, %v554
    %v556 = vrot.slane %v508, %v555
    %558 = vbcast.lane.b32.xlu0 %v556, 256
    %v559 = vpop.permute.xlu0 %558
    %v560 = vlaneseq
    %v561 = vshrl.u32 %v560, 7
    %v562 = vsub.s32 7, %v561
    %v563 = vrot.slane %v508, %v562
    %565 = vbcast.lane.b32.xlu0 %v563, 256
    %v566 = vpop.permute.xlu0 %565
    %vm567 = vcmp.eq.s32.totalorder %v510, %v517
    %vm568 = vcmp.eq.s32.totalorder %v510, %v524
    %vm569 = vcmp.eq.s32.totalorder %v510, %v531
    %vm570 = vcmp.eq.s32.totalorder %v510, %v538
    %vm571 = vcmp.eq.s32.totalorder %v510, %v545
    %vm572 = vcmp.eq.s32.totalorder %v510, %v552
    %vm573 = vcmp.eq.s32.totalorder %v510, %v559
    %vm574 = vcmp.eq.s32.totalorder %v510, %v566
    %v575 = vsel %vm567, 1, 0
    %v576 = vsel %vm568, 1, 0
    %v577 = vsel %vm569, 1, 0
    %v578 = vsel %vm570, 1, 0
    %v579 = vsel %vm571, 1, 0
    %v580 = vsel %vm572, 1, 0
    %v581 = vsel %vm573, 1, 0
    %v582 = vsel %vm574, 1, 0
    %v583 = vcvt.s32.f32 %v575
    %v584 = vcvt.s32.f32 %v576
    %v585 = vcvt.s32.f32 %v577
    %v586 = vcvt.s32.f32 %v578
    %v587 = vcvt.s32.f32 %v579
    %v588 = vcvt.s32.f32 %v580
    %v589 = vcvt.s32.f32 %v581
    %v590 = vcvt.s32.f32 %v582
    %v591 = vld [vmem:[#allocation2] sm:$0xff]
    %v592 = vld [vmem:[#allocation2 + $0x8] sm:$0xff]
    %v593 = vld [vmem:[#allocation2 + $0x10] sm:$0xff]
    %v594 = vld [vmem:[#allocation2 + $0x18] sm:$0xff]
    %v595 = vld [vmem:[#allocation2 + $0x20] sm:$0xff]
    %v596 = vld [vmem:[#allocation2 + $0x28] sm:$0xff]
    %v597 = vld [vmem:[#allocation2 + $0x30] sm:$0xff]
    %v598 = vld [vmem:[#allocation2 + $0x38] sm:$0xff]
    %v599 = vld [vmem:[#allocation2 + $0x40] sm:$0xff]
    %v600 = vld [vmem:[#allocation2 + $0x48] sm:$0xff]
    %v601 = vld [vmem:[#allocation2 + $0x50] sm:$0xff]
    %v602 = vld [vmem:[#allocation2 + $0x58] sm:$0xff]
    %v603 = vld [vmem:[#allocation2 + $0x60] sm:$0xff]
    %v604 = vld [vmem:[#allocation2 + $0x68] sm:$0xff]
    %v605 = vld [vmem:[#allocation2 + $0x70] sm:$0xff]
    %v606 = vld [vmem:[#allocation2 + $0x78] sm:$0xff]
    %607 = vmatprep.subr.mxu0 0.0
    %608 = vmatpush1.msra.mxu0 %v606
    %609 = vmatprep.subr.mxu0 0.0
    %610 = vmatpush1.msra.mxu0 %v605
    %611 = vmatprep.subr.mxu0 0.0
    %612 = vmatpush1.msra.mxu0 %v604
    %613 = vmatprep.subr.mxu0 0.0
    %614 = vmatpush1.msra.mxu0 %v603
    %615 = vmatprep.subr.mxu0 0.0
    %616 = vmatpush1.msra.mxu0 %v602
    %617 = vmatprep.subr.mxu0 0.0
    %618 = vmatpush1.msra.mxu0 %v601
    %619 = vmatprep.subr.mxu0 0.0
    %620 = vmatpush1.msra.mxu0 %v600
    %621 = vmatprep.subr.mxu0 0.0
    %622 = vmatpush1.msra.mxu0 %v599
    %623 = vmatprep.subr.mxu0 0.0
    %624 = vmatpush1.msra.mxu0 %v598
    %625 = vmatprep.subr.mxu0 0.0
    %626 = vmatpush1.msra.mxu0 %v597
    %627 = vmatprep.subr.mxu0 0.0
    %628 = vmatpush1.msra.mxu0 %v596
    %629 = vmatprep.subr.mxu0 0.0
    %630 = vmatpush1.msra.mxu0 %v595
    %631 = vmatprep.subr.mxu0 0.0
    %632 = vmatpush1.msra.mxu0 %v594
    %633 = vmatprep.subr.mxu0 0.0
    %634 = vmatpush1.msra.mxu0 %v593
    %635 = vmatprep.subr.mxu0 0.0
    %636 = vmatpush1.msra.mxu0 %v592
    %637 = vmatprep.subr.mxu0 0.0
    %638 = vmatpush1.msra.mxu0 %v591
    %639 = vmatprep.subr.mxu0 0.0
    %640 = vmatpush2.msra.mxu0 0.0
    %641 = vmatprep.subr.mxu0 0.0
    %642 = vmatpush2.msra.mxu0 0.0
    %643 = vmatprep.subr.mxu0 0.0
    %644 = vmatpush2.msra.mxu0 0.0
    %645 = vmatprep.subr.mxu0 0.0
    %646 = vmatpush2.msra.mxu0 0.0
    %647 = vmatprep.subr.mxu0 0.0
    %648 = vmatpush2.msra.mxu0 0.0
    %649 = vmatprep.subr.mxu0 0.0
    %650 = vmatpush2.msra.mxu0 0.0
    %651 = vmatprep.subr.mxu0 0.0
    %652 = vmatpush2.msra.mxu0 0.0
    %653 = vmatprep.subr.mxu0 0.0
    %654 = vmatpush2.msra.mxu0 0.0
    %655 = vmatprep.subr.mxu0 0.0
    %656 = vmatpush2.msra.mxu0 0.0
    %657 = vmatprep.subr.mxu0 0.0
    %658 = vmatpush2.msra.mxu0 0.0
    %659 = vmatprep.subr.mxu0 0.0
    %660 = vmatpush2.msra.mxu0 0.0
    %661 = vmatprep.subr.mxu0 0.0
    %662 = vmatpush2.msra.mxu0 0.0
    %663 = vmatprep.subr.mxu0 0.0
    %664 = vmatpush2.msra.mxu0 0.0
    %665 = vmatprep.subr.mxu0 0.0
    %666 = vmatpush2.msra.mxu0 0.0
    %667 = vmatprep.subr.mxu0 0.0
    %668 = vmatpush2.msra.mxu0 0.0
    %669 = vmatprep.subr.mxu0 0.0
    %670 = vmatpush2.msra.mxu0 0.0
    %671 = vmatprep.mubr.f32.mxu0 0.0
    %672 = vmatmul.mubr.f32.gmra.mxu0 %v583
    %v673 = vpop.f32.mrf.mxu0
    %v674 = vadd.f32 0.0, %v673
    %v675 = vpop.f32.mrf.mxu0
    %676 = vmatprep.mubr.f32.mxu0 0.0
    %677 = vmatmul.mubr.f32.gmra.mxu0 %v584
    %v678 = vpop.f32.mrf.mxu0
    %v679 = vadd.f32 0.0, %v678
    %v680 = vpop.f32.mrf.mxu0
    %681 = vmatprep.mubr.f32.mxu0 0.0
    %682 = vmatmul.mubr.f32.gmra.mxu0 %v585
    %v683 = vpop.f32.mrf.mxu0
    %v684 = vadd.f32 0.0, %v683
    %v685 = vpop.f32.mrf.mxu0
    %686 = vmatprep.mubr.f32.mxu0 0.0
    %687 = vmatmul.mubr.f32.gmra.mxu0 %v586
    %v688 = vpop.f32.mrf.mxu0
    %v689 = vadd.f32 0.0, %v688
    %v690 = vpop.f32.mrf.mxu0
    %691 = vmatprep.mubr.f32.mxu0 0.0
    %692 = vmatmul.mubr.f32.gmra.mxu0 %v587
    %v693 = vpop.f32.mrf.mxu0
    %v694 = vadd.f32 0.0, %v693
    %v695 = vpop.f32.mrf.mxu0
    %696 = vmatprep.mubr.f32.mxu0 0.0
    %697 = vmatmul.mubr.f32.gmra.mxu0 %v588
    %v698 = vpop.f32.mrf.mxu0
    %v699 = vadd.f32 0.0, %v698
    %v700 = vpop.f32.mrf.mxu0
    %701 = vmatprep.mubr.f32.mxu0 0.0
    %702 = vmatmul.mubr.f32.gmra.mxu0 %v589
    %v703 = vpop.f32.mrf.mxu0
    %v704 = vadd.f32 0.0, %v703
    %v705 = vpop.f32.mrf.mxu0
    %706 = vmatprep.mubr.f32.mxu0 0.0
    %707 = vmatmul.mubr.f32.gmra.mxu0 %v590
    %v708 = vpop.f32.mrf.mxu0
    %v709 = vadd.f32 0.0, %v708
    %v710 = vpop.f32.mrf.mxu0
    %711 = vdwg.mxu0
    %v712 = vld [vmem:[%s2] sm:$0xff]
    %v713 = vlaneseq
    %v714 = vshrl.u32 %v713, 7
    %v715 = vsub.s32 0, %v714
    %v716 = vrot.slane %v712, %v715
    %718 = vbcast.lane.b32.xlu0 %v716, 256
    %v719 = vpop.permute.xlu0 %718
    %v720 = vlaneseq
    %v721 = vshrl.u32 %v720, 7
    %v722 = vsub.s32 1, %v721
    %v723 = vrot.slane %v712, %v722
    %725 = vbcast.lane.b32.xlu0 %v723, 256
    %v726 = vpop.permute.xlu0 %725
    %v727 = vlaneseq
    %v728 = vshrl.u32 %v727, 7
    %v729 = vsub.s32 2, %v728
    %v730 = vrot.slane %v712, %v729
    %732 = vbcast.lane.b32.xlu0 %v730, 256
    %v733 = vpop.permute.xlu0 %732
    %v734 = vlaneseq
    %v735 = vshrl.u32 %v734, 7
    %v736 = vsub.s32 3, %v735
    %v737 = vrot.slane %v712, %v736
    %739 = vbcast.lane.b32.xlu0 %v737, 256
    %v740 = vpop.permute.xlu0 %739
    %v741 = vlaneseq
    %v742 = vshrl.u32 %v741, 7
    %v743 = vsub.s32 4, %v742
    %v744 = vrot.slane %v712, %v743
    %746 = vbcast.lane.b32.xlu0 %v744, 256
    %v747 = vpop.permute.xlu0 %746
    %v748 = vlaneseq
    %v749 = vshrl.u32 %v748, 7
    %v750 = vsub.s32 5, %v749
    %v751 = vrot.slane %v712, %v750
    %753 = vbcast.lane.b32.xlu0 %v751, 256
    %v754 = vpop.permute.xlu0 %753
    %v755 = vlaneseq
    %v756 = vshrl.u32 %v755, 7
    %v757 = vsub.s32 6, %v756
    %v758 = vrot.slane %v712, %v757
    %760 = vbcast.lane.b32.xlu0 %v758, 256
    %v761 = vpop.permute.xlu0 %760
    %v762 = vlaneseq
    %v763 = vshrl.u32 %v762, 7
    %v764 = vsub.s32 7, %v763
    %v765 = vrot.slane %v712, %v764
    %767 = vbcast.lane.b32.xlu0 %v765, 256
    %v768 = vpop.permute.xlu0 %767
    %v769 = vmul.f32 %v674, %v719
    %v770 = vmul.f32 %v679, %v726
    %v771 = vmul.f32 %v684, %v733
    %v772 = vmul.f32 %v689, %v740
    %v773 = vmul.f32 %v694, %v747
    %v774 = vmul.f32 %v699, %v754
    %v775 = vmul.f32 %v704, %v761
    %v776 = vmul.f32 %v709, %v768
    %v777 = vrot.slane %v769, 4
    %v778 = vadd.f32 %v769, %v777
    %v779 = vrot.slane %v778, 2
    %v780 = vadd.f32 %v778, %v779
    %v781 = vrot.slane %v780, 1
    %v782 = vadd.f32 %v780, %v781
    %v783 = vrot.slane %v770, 4
    %v784 = vadd.f32 %v770, %v783
    %v785 = vrot.slane %v784, 2
    %v786 = vadd.f32 %v784, %v785
    %v787 = vrot.slane %v786, 1
    %v788 = vadd.f32 %v786, %v787
    %v789 = vrot.slane %v771, 4
    %v790 = vadd.f32 %v771, %v789
    %v791 = vrot.slane %v790, 2
    %v792 = vadd.f32 %v790, %v791
    %v793 = vrot.slane %v792, 1
    %v794 = vadd.f32 %v792, %v793
    %v795 = vrot.slane %v772, 4
    %v796 = vadd.f32 %v772, %v795
    %v797 = vrot.slane %v796, 2
    %v798 = vadd.f32 %v796, %v797
    %v799 = vrot.slane %v798, 1
    %v800 = vadd.f32 %v798, %v799
    %v801 = vrot.slane %v773, 4
    %v802 = vadd.f32 %v773, %v801
    %v803 = vrot.slane %v802, 2
    %v804 = vadd.f32 %v802, %v803
    %v805 = vrot.slane %v804, 1
    %v806 = vadd.f32 %v804, %v805
    %v807 = vrot.slane %v774, 4
    %v808 = vadd.f32 %v774, %v807
    %v809 = vrot.slane %v808, 2
    %v810 = vadd.f32 %v808, %v809
    %v811 = vrot.slane %v810, 1
    %v812 = vadd.f32 %v810, %v811
    %v813 = vrot.slane %v775, 4
    %v814 = vadd.f32 %v775, %v813
    %v815 = vrot.slane %v814, 2
    %v816 = vadd.f32 %v814, %v815
    %v817 = vrot.slane %v816, 1
    %v818 = vadd.f32 %v816, %v817
    %v819 = vrot.slane %v776, 4
    %v820 = vadd.f32 %v776, %v819
    %v821 = vrot.slane %v820, 2
    %v822 = vadd.f32 %v820, %v821
    %v823 = vrot.slane %v822, 1
    %v824 = vadd.f32 %v822, %v823
    %vm825 = vcmask 64512
    %v826 = vsel %vm825, %v712, 0.0
    %827 = vadd.xlane.f32.xlu0 %v826
    %v828 = vpop.xlane.xlu0 %827
    %v829 = vmax.f32 %v828, 1.0
    %v831 = vrot.slane %v829, 1
    %v832 = vrot.slane %v829, 2
    %v833 = vrot.slane %v829, 3
    %v834 = vrot.slane %v829, 4
    %v835 = vrot.slane %v829, 5
    %v836 = vrot.slane %v829, 6
    %v837 = vrot.slane %v829, 7
    %v846 = vrcp.pop %v829
    %v847 = vmul.f32 %v782, %v846
    %v848 = vrcp.pop %v831
    %v849 = vmul.f32 %v788, %v848
    %v850 = vrcp.pop %v832
    %v851 = vmul.f32 %v794, %v850
    %v852 = vrcp.pop %v833
    %v853 = vmul.f32 %v800, %v852
    %v854 = vrcp.pop %v834
    %v855 = vmul.f32 %v806, %v854
    %v856 = vrcp.pop %v835
    %v857 = vmul.f32 %v812, %v856
    %v858 = vrcp.pop %v836
    %v859 = vmul.f32 %v818, %v858
    %v860 = vrcp.pop %v837
    %v861 = vmul.f32 %v824, %v860
    %v862 = vld [vmem:[#allocation8] sm:$0xff]
    %v863 = vld [vmem:[#allocation8 + $0x8] sm:$0xff]
    %v864 = vld [vmem:[#allocation8 + $0x10] sm:$0xff]
    %v865 = vld [vmem:[#allocation8 + $0x18] sm:$0xff]
    %v866 = vld [vmem:[#allocation8 + $0x20] sm:$0xff]
    %v867 = vld [vmem:[#allocation8 + $0x28] sm:$0xff]
    %v868 = vld [vmem:[#allocation8 + $0x30] sm:$0xff]
    %v869 = vld [vmem:[#allocation8 + $0x38] sm:$0xff]
    %v870 = vld [vmem:[#allocation8 + $0x40] sm:$0xff]
    %v871 = vld [vmem:[#allocation8 + $0x48] sm:$0xff]
    %v872 = vld [vmem:[#allocation8 + $0x50] sm:$0xff]
    %v873 = vld [vmem:[#allocation8 + $0x58] sm:$0xff]
    %v874 = vld [vmem:[#allocation8 + $0x60] sm:$0xff]
    %v875 = vld [vmem:[#allocation8 + $0x68] sm:$0xff]
    %v876 = vld [vmem:[#allocation8 + $0x70] sm:$0xff]
    %v877 = vld [vmem:[#allocation8 + $0x78] sm:$0xff]
    %v878 = vld [vmem:[%s12] sm:$0x1]
    %v880 = vlaneseq
    %v881 = vshrl.u32 %v880, 7
    %v882 = vsub.s32 0, %v881
    %v883 = vrot.slane %v878, %v882
    %v893 = vrot.slane %v849, 7
    %vm894 = vcmask 1041409
    %v895 = vsel %vm894, %v893, %v847
    %v896 = vrot.slane %v851, 6
    %vm897 = vcmask 1042434
    %v898 = vsel %vm897, %v896, %v895
    %v899 = vrot.slane %v853, 5
    %vm900 = vcmask 1043459
    %v901 = vsel %vm900, %v899, %v898
    %v902 = vrot.slane %v855, 4
    %vm903 = vcmask 1044484
    %v904 = vsel %vm903, %v902, %v901
    %v905 = vrot.slane %v857, 3
    %vm906 = vcmask 1045509
    %v907 = vsel %vm906, %v905, %v904
    %v908 = vrot.slane %v859, 2
    %vm909 = vcmask 1046534
    %v910 = vsel %vm909, %v908, %v907
    %v911 = vrot.slane %v861, 1
    %vm912 = vcmask 1047559
    %v913 = vsel %vm912, %v911, %v910
    %915 = vmatprep.subr.mxu0 0.0
    %916 = vmatpush1.msra.mxu0 %v877
    %917 = vmatprep.subr.mxu0 0.0
    %918 = vmatpush1.msra.mxu0 %v876
    %919 = vmatprep.subr.mxu0 0.0
    %920 = vmatpush1.msra.mxu0 %v875
    %921 = vmatprep.subr.mxu0 0.0
    %922 = vmatpush1.msra.mxu0 %v874
    %923 = vmatprep.subr.mxu0 0.0
    %924 = vmatpush1.msra.mxu0 %v873
    %925 = vmatprep.subr.mxu0 0.0
    %926 = vmatpush1.msra.mxu0 %v872
    %927 = vmatprep.subr.mxu0 0.0
    %928 = vmatpush1.msra.mxu0 %v871
    %929 = vmatprep.subr.mxu0 0.0
    %930 = vmatpush1.msra.mxu0 %v870
    %931 = vmatprep.subr.mxu0 0.0
    %932 = vmatpush1.msra.mxu0 %v869
    %933 = vmatprep.subr.mxu0 0.0
    %934 = vmatpush1.msra.mxu0 %v868
    %935 = vmatprep.subr.mxu0 0.0
    %936 = vmatpush1.msra.mxu0 %v867
    %937 = vmatprep.subr.mxu0 0.0
    %938 = vmatpush1.msra.mxu0 %v866
    %939 = vmatprep.subr.mxu0 0.0
    %940 = vmatpush1.msra.mxu0 %v865
    %941 = vmatprep.subr.mxu0 0.0
    %942 = vmatpush1.msra.mxu0 %v864
    %943 = vmatprep.subr.mxu0 0.0
    %944 = vmatpush1.msra.mxu0 %v863
    %945 = vmatprep.subr.mxu0 0.0
    %946 = vmatpush1.msra.mxu0 %v862
    %947 = vmatprep.subr.mxu0 0.0
    %948 = vmatpush2.msra.mxu0 0.0
    %949 = vmatprep.subr.mxu0 0.0
    %950 = vmatpush2.msra.mxu0 0.0
    %951 = vmatprep.subr.mxu0 0.0
    %952 = vmatpush2.msra.mxu0 0.0
    %953 = vmatprep.subr.mxu0 0.0
    %954 = vmatpush2.msra.mxu0 0.0
    %955 = vmatprep.subr.mxu0 0.0
    %956 = vmatpush2.msra.mxu0 0.0
    %957 = vmatprep.subr.mxu0 0.0
    %958 = vmatpush2.msra.mxu0 0.0
    %959 = vmatprep.subr.mxu0 0.0
    %960 = vmatpush2.msra.mxu0 0.0
    %961 = vmatprep.subr.mxu0 0.0
    %962 = vmatpush2.msra.mxu0 0.0
    %963 = vmatprep.subr.mxu0 0.0
    %964 = vmatpush2.msra.mxu0 0.0
    %965 = vmatprep.subr.mxu0 0.0
    %966 = vmatpush2.msra.mxu0 0.0
    %967 = vmatprep.subr.mxu0 0.0
    %968 = vmatpush2.msra.mxu0 0.0
    %969 = vmatprep.subr.mxu0 0.0
    %970 = vmatpush2.msra.mxu0 0.0
    %971 = vmatprep.subr.mxu0 0.0
    %972 = vmatpush2.msra.mxu0 0.0
    %973 = vmatprep.subr.mxu0 0.0
    %974 = vmatpush2.msra.mxu0 0.0
    %975 = vmatprep.subr.mxu0 0.0
    %976 = vmatpush2.msra.mxu0 0.0
    %977 = vmatprep.subr.mxu0 0.0
    %978 = vmatpush2.msra.mxu0 0.0
    %979 = vmatprep.mubr.f32.mxu0 0.0
    %980 = vmatmul.mubr.f32.gmra.mxu0 %v913
    %v981 = vpop.f32.mrf.mxu0
    %v982 = vadd.f32 %v883, %v981
    %v983 = vpop.f32.mrf.mxu0
    %984 = vdwg.mxu0
    %v985 = vtanh.pop %v982
    %v986 = vld [vmem:[#allocation10] sm:$0xff]
    %v987 = vld [vmem:[#allocation10 + $0x8] sm:$0xff]
    %v988 = vld [vmem:[#allocation10 + $0x10] sm:$0xff]
    %v989 = vld [vmem:[#allocation10 + $0x18] sm:$0xff]
    %v990 = vld [vmem:[#allocation10 + $0x20] sm:$0xff]
    %v991 = vld [vmem:[#allocation10 + $0x28] sm:$0xff]
    %v992 = vld [vmem:[#allocation10 + $0x30] sm:$0xff]
    %v993 = vld [vmem:[#allocation10 + $0x38] sm:$0xff]
    %v994 = vld [vmem:[#allocation10 + $0x40] sm:$0xff]
    %v995 = vld [vmem:[#allocation10 + $0x48] sm:$0xff]
    %v996 = vld [vmem:[#allocation10 + $0x50] sm:$0xff]
    %v997 = vld [vmem:[#allocation10 + $0x58] sm:$0xff]
    %v998 = vld [vmem:[#allocation10 + $0x60] sm:$0xff]
    %v999 = vld [vmem:[#allocation10 + $0x68] sm:$0xff]
    %v1000 = vld [vmem:[#allocation10 + $0x70] sm:$0xff]
    %v1001 = vld [vmem:[#allocation10 + $0x78] sm:$0xff]
    %v1002 = vld [vmem:[%s14] sm:$0x1]
    %v1004 = vlaneseq
    %v1005 = vshrl.u32 %v1004, 7
    %v1006 = vsub.s32 0, %v1005
    %v1007 = vrot.slane %v1002, %v1006
    %1009 = vmatprep.subr.mxu0 0.0
    %1010 = vmatpush1.msra.mxu0 %v1001
    %1011 = vmatprep.subr.mxu0 0.0
    %1012 = vmatpush1.msra.mxu0 %v1000
    %1013 = vmatprep.subr.mxu0 0.0
    %1014 = vmatpush1.msra.mxu0 %v999
    %1015 = vmatprep.subr.mxu0 0.0
    %1016 = vmatpush1.msra.mxu0 %v998
    %1017 = vmatprep.subr.mxu0 0.0
    %1018 = vmatpush1.msra.mxu0 %v997
    %1019 = vmatprep.subr.mxu0 0.0
    %1020 = vmatpush1.msra.mxu0 %v996
    %1021 = vmatprep.subr.mxu0 0.0
    %1022 = vmatpush1.msra.mxu0 %v995
    %1023 = vmatprep.subr.mxu0 0.0
    %1024 = vmatpush1.msra.mxu0 %v994
    %1025 = vmatprep.subr.mxu0 0.0
    %1026 = vmatpush1.msra.mxu0 %v993
    %1027 = vmatprep.subr.mxu0 0.0
    %1028 = vmatpush1.msra.mxu0 %v992
    %1029 = vmatprep.subr.mxu0 0.0
    %1030 = vmatpush1.msra.mxu0 %v991
    %1031 = vmatprep.subr.mxu0 0.0
    %1032 = vmatpush1.msra.mxu0 %v990
    %1033 = vmatprep.subr.mxu0 0.0
    %1034 = vmatpush1.msra.mxu0 %v989
    %1035 = vmatprep.subr.mxu0 0.0
    %1036 = vmatpush1.msra.mxu0 %v988
    %1037 = vmatprep.subr.mxu0 0.0
    %1038 = vmatpush1.msra.mxu0 %v987
    %1039 = vmatprep.subr.mxu0 0.0
    %1040 = vmatpush1.msra.mxu0 %v986
    %1041 = vmatprep.subr.mxu0 0.0
    %1042 = vmatpush2.msra.mxu0 0.0
    %1043 = vmatprep.subr.mxu0 0.0
    %1044 = vmatpush2.msra.mxu0 0.0
    %1045 = vmatprep.subr.mxu0 0.0
    %1046 = vmatpush2.msra.mxu0 0.0
    %1047 = vmatprep.subr.mxu0 0.0
    %1048 = vmatpush2.msra.mxu0 0.0
    %1049 = vmatprep.subr.mxu0 0.0
    %1050 = vmatpush2.msra.mxu0 0.0
    %1051 = vmatprep.subr.mxu0 0.0
    %1052 = vmatpush2.msra.mxu0 0.0
    %1053 = vmatprep.subr.mxu0 0.0
    %1054 = vmatpush2.msra.mxu0 0.0
    %1055 = vmatprep.subr.mxu0 0.0
    %1056 = vmatpush2.msra.mxu0 0.0
    %1057 = vmatprep.subr.mxu0 0.0
    %1058 = vmatpush2.msra.mxu0 0.0
    %1059 = vmatprep.subr.mxu0 0.0
    %1060 = vmatpush2.msra.mxu0 0.0
    %1061 = vmatprep.subr.mxu0 0.0
    %1062 = vmatpush2.msra.mxu0 0.0
    %1063 = vmatprep.subr.mxu0 0.0
    %1064 = vmatpush2.msra.mxu0 0.0
    %1065 = vmatprep.subr.mxu0 0.0
    %1066 = vmatpush2.msra.mxu0 0.0
    %1067 = vmatprep.subr.mxu0 0.0
    %1068 = vmatpush2.msra.mxu0 0.0
    %1069 = vmatprep.subr.mxu0 0.0
    %1070 = vmatpush2.msra.mxu0 0.0
    %1071 = vmatprep.subr.mxu0 0.0
    %1072 = vmatpush2.msra.mxu0 0.0
    %1073 = vmatprep.mubr.f32.mxu0 0.0
    %1074 = vmatmul.mubr.f32.gmra.mxu0 %v913
    %v1075 = vpop.f32.mrf.mxu0
    %v1076 = vadd.f32 %v1007, %v1075
    %v1077 = vpop.f32.mrf.mxu0
    %1078 = vdwg.mxu0
    %v1079 = vtanh.pop %v1076
    %v1080 = vmul.f32 %v985, %v985
    %1081 = vadd.xlane.f32.xlu0 %v1080
    %v1082 = vpop.xlane.xlu0 %1081
    %v1083 = vmul.f32 %v504, %v504
    %v1084 = vmul.f32 %v505, %v505
    %1085 = vadd.xlane.f32.xlu0 %v1083
    %v1086 = vpop.xlane.xlu0 %1085
    %1087 = vadd.xlane.f32.xlu0 %v1084
    %v1088 = vpop.xlane.xlu0 %1087
    %1089 = vmatprep.subr.mxu0 0.0
    %1090 = vmatpush1.xpose.msra.mxu0 0.0
    %1091 = vmatprep.subr.mxu0 0.0
    %1092 = vmatpush1.xpose.msra.mxu0 0.0
    %1093 = vmatprep.subr.mxu0 0.0
    %1094 = vmatpush1.xpose.msra.mxu0 0.0
    %1095 = vmatprep.subr.mxu0 0.0
    %1096 = vmatpush1.xpose.msra.mxu0 0.0
    %1097 = vmatprep.subr.mxu0 0.0
    %1098 = vmatpush1.xpose.msra.mxu0 0.0
    %1099 = vmatprep.subr.mxu0 0.0
    %1100 = vmatpush1.xpose.msra.mxu0 0.0
    %1101 = vmatprep.subr.mxu0 0.0
    %1102 = vmatpush1.xpose.msra.mxu0 0.0
    %1103 = vmatprep.subr.mxu0 0.0
    %1104 = vmatpush1.xpose.msra.mxu0 0.0
    %1105 = vmatprep.subr.mxu0 0.0
    %1106 = vmatpush1.xpose.msra.mxu0 0.0
    %1107 = vmatprep.subr.mxu0 0.0
    %1108 = vmatpush1.xpose.msra.mxu0 0.0
    %1109 = vmatprep.subr.mxu0 0.0
    %1110 = vmatpush1.xpose.msra.mxu0 0.0
    %1111 = vmatprep.subr.mxu0 0.0
    %1112 = vmatpush1.xpose.msra.mxu0 0.0
    %1113 = vmatprep.subr.mxu0 0.0
    %1114 = vmatpush1.xpose.msra.mxu0 0.0
    %1115 = vmatprep.subr.mxu0 0.0
    %1116 = vmatpush1.xpose.msra.mxu0 0.0
    %1117 = vmatprep.subr.mxu0 0.0
    %1118 = vmatpush1.xpose.msra.mxu0 %v505
    %1119 = vmatprep.subr.mxu0 0.0
    %1120 = vmatpush1.xpose.msra.mxu0 %v504
    %1121 = vmatprep.subr.mxu0 0.0
    %1122 = vmatpush2.xpose.msra.mxu0 0.0
    %1123 = vmatprep.subr.mxu0 0.0
    %1124 = vmatpush2.xpose.msra.mxu0 0.0
    %1125 = vmatprep.subr.mxu0 0.0
    %1126 = vmatpush2.xpose.msra.mxu0 0.0
    %1127 = vmatprep.subr.mxu0 0.0
    %1128 = vmatpush2.xpose.msra.mxu0 0.0
    %1129 = vmatprep.subr.mxu0 0.0
    %1130 = vmatpush2.xpose.msra.mxu0 0.0
    %1131 = vmatprep.subr.mxu0 0.0
    %1132 = vmatpush2.xpose.msra.mxu0 0.0
    %1133 = vmatprep.subr.mxu0 0.0
    %1134 = vmatpush2.xpose.msra.mxu0 0.0
    %1135 = vmatprep.subr.mxu0 0.0
    %1136 = vmatpush2.xpose.msra.mxu0 0.0
    %1137 = vmatprep.subr.mxu0 0.0
    %1138 = vmatpush2.xpose.msra.mxu0 0.0
    %1139 = vmatprep.subr.mxu0 0.0
    %1140 = vmatpush2.xpose.msra.mxu0 0.0
    %1141 = vmatprep.subr.mxu0 0.0
    %1142 = vmatpush2.xpose.msra.mxu0 0.0
    %1143 = vmatprep.subr.mxu0 0.0
    %1144 = vmatpush2.xpose.msra.mxu0 0.0
    %1145 = vmatprep.subr.mxu0 0.0
    %1146 = vmatpush2.xpose.msra.mxu0 0.0
    %1147 = vmatprep.subr.mxu0 0.0
    %1148 = vmatpush2.xpose.msra.mxu0 0.0
    %1149 = vmatprep.subr.mxu0 0.0
    %1150 = vmatpush2.xpose.msra.mxu0 0.0
    %1151 = vmatprep.subr.mxu0 0.0
    %1152 = vmatpush2.xpose.msra.mxu0 0.0
    %1153 = vmatprep.mubr.f32.mxu0 0.0
    %1154 = vmatmul.mubr.f32.gmra.mxu0 %v985
    %v1155 = vpop.f32.mrf.mxu0
    %v1156 = vadd.f32 0.0, %v1155
    %v1157 = vpop.f32.mrf.mxu0
    %1158 = vdwg.mxu0
    %v1159 = vmul.f32 %v1156, 2.0
    %v1160 = vsub.f32 %v1082, %v1159
    %v1163 = vlaneseq
    %v1164 = vshrl.u32 %v1163, 7
    %v1165 = vsub.s32 %v510, %v1164
    %v1166 = vrot.slane %v1086, %v1165
    %v1167 = vadd.s32 %v510, 4294967288
    %v1168 = vlaneseq
    %v1169 = vshrl.u32 %v1168, 7
    %v1170 = vsub.s32 %v1167, %v1169
    %v1171 = vrot.slane %v1088, %v1170
    %vm1172 = vcmask 130112
    %v1173 = vsel %vm1172, %v1171, %v1166
    %v1174 = vsel %vm897, %v1173, %v1173
    %v1175 = vsel %vm900, %v1173, %v1174
    %v1176 = vsel %vm903, %v1173, %v1175
    %v1177 = vsel %vm906, %v1173, %v1176
    %v1178 = vsel %vm909, %v1173, %v1177
    %v1179 = vsel %vm912, %v1173, %v1178
    %v1181 = vadd.f32 %v1160, %v1179
    %v1182 = vsel %vm151, %v1181, inf
    %1183 = vmin.xlane.f32.xlu0 %v1182
    %v1184 = vpop.xlane.xlu0 %1183
    %vm1185 = vcmp.le.f32.partialorder %v1181, %v1184
    %v1186 = vsel %vm1185, %v510, 16
    %v1187 = vsel %vm151, %v1186, 2147483647
    %v1188 = vand.u32 %v1187, 65535
    %v1189 = vshra.s32 %v1187, 16
    %v1190 = vcvt.s32.f32 %v1188
    %v1191 = vcvt.s32.f32 %v1189
    %1192 = vmin.xlane.f32.xlu0 %v1191
    %v1193 = vpop.xlane.xlu0 %1192
    %vm1194 = vcmp.eq.f32.partialorder %v1191, %v1193
    %v1195 = vsel %vm1194, %v1190, inf
    %1196 = vmin.xlane.f32.xlu0 %v1195
    %v1197 = vpop.xlane.xlu0 %1196
    %v1198 = vcvt.f32.s32 %v1197
    %v1199 = vcvt.f32.s32 %v1193
    %v1200 = vshll.u32 %v1199, 16
    %v1201 = vadd.s32 %v1200, %v1198
    %vm1202 = vcmp.eq.s32.totalorder %v510, %v1201
    %v1203 = vsel %vm1202, 1, 0
    %v1204 = vcvt.s32.f32 %v1203
    %v1206 = vsel %vm151, %v1204, 0
    %1208 = vmatprep.subr.mxu0 0.0
    %1209 = vmatpush1.msra.mxu0 0.0
    %1210 = vmatprep.subr.mxu0 0.0
    %1211 = vmatpush1.msra.mxu0 0.0
    %1212 = vmatprep.subr.mxu0 0.0
    %1213 = vmatpush1.msra.mxu0 0.0
    %1214 = vmatprep.subr.mxu0 0.0
    %1215 = vmatpush1.msra.mxu0 0.0
    %1216 = vmatprep.subr.mxu0 0.0
    %1217 = vmatpush1.msra.mxu0 0.0
    %1218 = vmatprep.subr.mxu0 0.0
    %1219 = vmatpush1.msra.mxu0 0.0
    %1220 = vmatprep.subr.mxu0 0.0
    %1221 = vmatpush1.msra.mxu0 0.0
    %1222 = vmatprep.subr.mxu0 0.0
    %1223 = vmatpush1.msra.mxu0 0.0
    %1224 = vmatprep.subr.mxu0 0.0
    %1225 = vmatpush1.msra.mxu0 0.0
    %1226 = vmatprep.subr.mxu0 0.0
    %1227 = vmatpush1.msra.mxu0 0.0
    %1228 = vmatprep.subr.mxu0 0.0
    %1229 = vmatpush1.msra.mxu0 0.0
    %1230 = vmatprep.subr.mxu0 0.0
    %1231 = vmatpush1.msra.mxu0 0.0
    %1232 = vmatprep.subr.mxu0 0.0
    %1233 = vmatpush1.msra.mxu0 0.0
    %1234 = vmatprep.subr.mxu0 0.0
    %1235 = vmatpush1.msra.mxu0 0.0
    %1236 = vmatprep.subr.mxu0 0.0
    %1237 = vmatpush1.msra.mxu0 %v505
    %1238 = vmatprep.subr.mxu0 0.0
    %1239 = vmatpush1.msra.mxu0 %v504
    %1240 = vmatprep.subr.mxu0 0.0
    %1241 = vmatpush2.msra.mxu0 0.0
    %1242 = vmatprep.subr.mxu0 0.0
    %1243 = vmatpush2.msra.mxu0 0.0
    %1244 = vmatprep.subr.mxu0 0.0
    %1245 = vmatpush2.msra.mxu0 0.0
    %1246 = vmatprep.subr.mxu0 0.0
    %1247 = vmatpush2.msra.mxu0 0.0
    %1248 = vmatprep.subr.mxu0 0.0
    %1249 = vmatpush2.msra.mxu0 0.0
    %1250 = vmatprep.subr.mxu0 0.0
    %1251 = vmatpush2.msra.mxu0 0.0
    %1252 = vmatprep.subr.mxu0 0.0
    %1253 = vmatpush2.msra.mxu0 0.0
    %1254 = vmatprep.subr.mxu0 0.0
    %1255 = vmatpush2.msra.mxu0 0.0
    %1256 = vmatprep.subr.mxu0 0.0
    %1257 = vmatpush2.msra.mxu0 0.0
    %1258 = vmatprep.subr.mxu0 0.0
    %1259 = vmatpush2.msra.mxu0 0.0
    %1260 = vmatprep.subr.mxu0 0.0
    %1261 = vmatpush2.msra.mxu0 0.0
    %1262 = vmatprep.subr.mxu0 0.0
    %1263 = vmatpush2.msra.mxu0 0.0
    %1264 = vmatprep.subr.mxu0 0.0
    %1265 = vmatpush2.msra.mxu0 0.0
    %1266 = vmatprep.subr.mxu0 0.0
    %1267 = vmatpush2.msra.mxu0 0.0
    %1268 = vmatprep.subr.mxu0 0.0
    %1269 = vmatpush2.msra.mxu0 0.0
    %1270 = vmatprep.subr.mxu0 0.0
    %1271 = vmatpush2.msra.mxu0 0.0
    %1272 = vmatprep.mubr.f32.mxu0 0.0
    %1273 = vmatmul.mubr.f32.gmra.mxu0 %v1206
    %v1274 = vpop.f32.mrf.mxu0
    %v1275 = vadd.f32 0.0, %v1274
    %v1276 = vpop.f32.mrf.mxu0
    %1277 = vdwg.mxu0
    %1278 = vst.msk [vmem:[%s17] sm:$0xff] %vm151, %v1181
    %1279 = vst [vmem:[#allocation14] sm:$0xff] %v1275
    %v1280 = vld [vmem:[%s1] sm:$0xff]
    %1281 = vset.pattern.permute.xlu0 0
    %1282 = vperm.xlu0 %1281, %v1280
    %v1283 = vpop.permute.xlu0 %1282
    %vm1284 = vcmp.eq.s32.totalorder %v510, %v1283
    %v1285 = vsel %vm1284, 1, 0
    %v1286 = vcvt.s32.f32 %v1285
    %v1287 = vsub.f32 0.0, %v1181
    %v1288 = vsel %vm151, %v1287, -inf
    %1289 = vmax.xlane.f32.xlu0 %v1288
    %v1290 = vpop.xlane.xlu0 %1289
    %v1291 = vsub.f32 %v1287, %v1290
    %v1292 = vmul.f32 %v1291, 1.442695
    %v1293 = vpow.pop %v1292
    %v1294 = vsel %vm151, %v1293, 0.0
    %1295 = vadd.xlane.f32.xlu0 %v1294
    %v1296 = vpop.xlane.xlu0 %1295
    %v1297 = vlog2.pop %v1296
    %v1298 = vmul.f32 %v1297, 0.6931472
    %v1299 = vadd.f32 %v1290, %v1298
    %v1300 = vmul.f32 %v1287, %v1286
    %v1301 = vsel %vm151, %v1300, 0.0
    %1302 = vadd.xlane.f32.xlu0 %v1301
    %v1303 = vpop.xlane.xlu0 %1302
    %v1304 = vsub.f32 %v1299, %v1303
    %v1305 = vrot.slane %v1304, 4
    %v1306 = vadd.f32 %v1304, %v1305
    %v1307 = vrot.slane %v1306, 2
    %v1308 = vadd.f32 %v1306, %v1307
    %v1309 = vrot.slane %v1308, 1
    %v1310 = vadd.f32 %v1308, %v1309
    %v1311 = vmul.f32 %v1310, 0.125
    %vm1312 = vcmask 0
    %1313 = vst.msk [vmem:[#allocation20] sm:$0x1] %vm1312, %v1311
    %v1314 = vld [vmem:[%s6] sm:$0xff]
    %v1315 = vld [vmem:[%s6 + $0x8] sm:$0xff]
    %v1316 = vmul.f32 %v1079, %v1079
    %1317 = vadd.xlane.f32.xlu0 %v1316
    %v1318 = vpop.xlane.xlu0 %1317
    %v1319 = vmul.f32 %v1314, %v1314
    %v1320 = vmul.f32 %v1315, %v1315
    %1321 = vadd.xlane.f32.xlu0 %v1319
    %v1322 = vpop.xlane.xlu0 %1321
    %1323 = vadd.xlane.f32.xlu0 %v1320
    %v1324 = vpop.xlane.xlu0 %1323
    %1325 = vmatprep.subr.mxu0 0.0
    %1326 = vmatpush1.xpose.msra.mxu0 0.0
    %1327 = vmatprep.subr.mxu0 0.0
    %1328 = vmatpush1.xpose.msra.mxu0 0.0
    %1329 = vmatprep.subr.mxu0 0.0
    %1330 = vmatpush1.xpose.msra.mxu0 0.0
    %1331 = vmatprep.subr.mxu0 0.0
    %1332 = vmatpush1.xpose.msra.mxu0 0.0
    %1333 = vmatprep.subr.mxu0 0.0
    %1334 = vmatpush1.xpose.msra.mxu0 0.0
    %1335 = vmatprep.subr.mxu0 0.0
    %1336 = vmatpush1.xpose.msra.mxu0 0.0
    %1337 = vmatprep.subr.mxu0 0.0
    %1338 = vmatpush1.xpose.msra.mxu0 0.0
    %1339 = vmatprep.subr.mxu0 0.0
    %1340 = vmatpush1.xpose.msra.mxu0 0.0
    %1341 = vmatprep.subr.mxu0 0.0
    %1342 = vmatpush1.xpose.msra.mxu0 0.0
    %1343 = vmatprep.subr.mxu0 0.0
    %1344 = vmatpush1.xpose.msra.mxu0 0.0
    %1345 = vmatprep.subr.mxu0 0.0
    %1346 = vmatpush1.xpose.msra.mxu0 0.0
    %1347 = vmatprep.subr.mxu0 0.0
    %1348 = vmatpush1.xpose.msra.mxu0 0.0
    %1349 = vmatprep.subr.mxu0 0.0
    %1350 = vmatpush1.xpose.msra.mxu0 0.0
    %1351 = vmatprep.subr.mxu0 0.0
    %1352 = vmatpush1.xpose.msra.mxu0 0.0
    %1353 = vmatprep.subr.mxu0 0.0
    %1354 = vmatpush1.xpose.msra.mxu0 %v1315
    %1355 = vmatprep.subr.mxu0 0.0
    %1356 = vmatpush1.xpose.msra.mxu0 %v1314
    %1357 = vmatprep.subr.mxu0 0.0
    %1358 = vmatpush2.xpose.msra.mxu0 0.0
    %1359 = vmatprep.subr.mxu0 0.0
    %1360 = vmatpush2.xpose.msra.mxu0 0.0
    %1361 = vmatprep.subr.mxu0 0.0
    %1362 = vmatpush2.xpose.msra.mxu0 0.0
    %1363 = vmatprep.subr.mxu0 0.0
    %1364 = vmatpush2.xpose.msra.mxu0 0.0
    %1365 = vmatprep.subr.mxu0 0.0
    %1366 = vmatpush2.xpose.msra.mxu0 0.0
    %1367 = vmatprep.subr.mxu0 0.0
    %1368 = vmatpush2.xpose.msra.mxu0 0.0
    %1369 = vmatprep.subr.mxu0 0.0
    %1370 = vmatpush2.xpose.msra.mxu0 0.0
    %1371 = vmatprep.subr.mxu0 0.0
    %1372 = vmatpush2.xpose.msra.mxu0 0.0
    %1373 = vmatprep.subr.mxu0 0.0
    %1374 = vmatpush2.xpose.msra.mxu0 0.0
    %1375 = vmatprep.subr.mxu0 0.0
    %1376 = vmatpush2.xpose.msra.mxu0 0.0
    %1377 = vmatprep.subr.mxu0 0.0
    %1378 = vmatpush2.xpose.msra.mxu0 0.0
    %1379 = vmatprep.subr.mxu0 0.0
    %1380 = vmatpush2.xpose.msra.mxu0 0.0
    %1381 = vmatprep.subr.mxu0 0.0
    %1382 = vmatpush2.xpose.msra.mxu0 0.0
    %1383 = vmatprep.subr.mxu0 0.0
    %1384 = vmatpush2.xpose.msra.mxu0 0.0
    %1385 = vmatprep.subr.mxu0 0.0
    %1386 = vmatpush2.xpose.msra.mxu0 0.0
    %1387 = vmatprep.subr.mxu0 0.0
    %1388 = vmatpush2.xpose.msra.mxu0 0.0
    %1389 = vmatprep.mubr.f32.mxu0 0.0
    %1390 = vmatmul.mubr.f32.gmra.mxu0 %v1079
    %v1391 = vpop.f32.mrf.mxu0
    %v1392 = vadd.f32 0.0, %v1391
    %v1393 = vpop.f32.mrf.mxu0
    %1394 = vdwg.mxu0
    %v1395 = vmul.f32 %v1392, 2.0
    %v1396 = vsub.f32 %v1318, %v1395
    %v1399 = vlaneseq
    %v1400 = vshrl.u32 %v1399, 7
    %v1401 = vsub.s32 %v510, %v1400
    %v1402 = vrot.slane %v1322, %v1401
    %v1403 = vlaneseq
    %v1404 = vshrl.u32 %v1403, 7
    %v1405 = vsub.s32 %v1167, %v1404
    %v1406 = vrot.slane %v1324, %v1405
    %v1407 = vsel %vm1172, %v1406, %v1402
    %v1408 = vsel %vm897, %v1407, %v1407
    %v1409 = vsel %vm900, %v1407, %v1408
    %v1410 = vsel %vm903, %v1407, %v1409
    %v1411 = vsel %vm906, %v1407, %v1410
    %v1412 = vsel %vm909, %v1407, %v1411
    %v1413 = vsel %vm912, %v1407, %v1412
    %v1415 = vadd.f32 %v1396, %v1413
    %v1416 = vsel %vm151, %v1415, inf
    %1417 = vmin.xlane.f32.xlu0 %v1416
    %v1418 = vpop.xlane.xlu0 %1417
    %vm1419 = vcmp.le.f32.partialorder %v1415, %v1418
    %v1420 = vsel %vm1419, %v510, 16
    %v1421 = vsel %vm151, %v1420, 2147483647
    %v1422 = vand.u32 %v1421, 65535
    %v1423 = vshra.s32 %v1421, 16
    %v1424 = vcvt.s32.f32 %v1422
    %v1425 = vcvt.s32.f32 %v1423
    %1426 = vmin.xlane.f32.xlu0 %v1425
    %v1427 = vpop.xlane.xlu0 %1426
    %vm1428 = vcmp.eq.f32.partialorder %v1425, %v1427
    %v1429 = vsel %vm1428, %v1424, inf
    %1430 = vmin.xlane.f32.xlu0 %v1429
    %v1431 = vpop.xlane.xlu0 %1430
    %v1432 = vcvt.f32.s32 %v1431
    %v1433 = vcvt.f32.s32 %v1427
    %v1434 = vshll.u32 %v1433, 16
    %v1435 = vadd.s32 %v1434, %v1432
    %vm1436 = vcmp.eq.s32.totalorder %v510, %v1435
    %v1437 = vsel %vm1436, 1, 0
    %v1438 = vcvt.s32.f32 %v1437
    %v1440 = vsel %vm151, %v1438, 0
    %1442 = vmatprep.subr.mxu0 0.0
    %1443 = vmatpush1.msra.mxu0 0.0
    %1444 = vmatprep.subr.mxu0 0.0
    %1445 = vmatpush1.msra.mxu0 0.0
    %1446 = vmatprep.subr.mxu0 0.0
    %1447 = vmatpush1.msra.mxu0 0.0
    %1448 = vmatprep.subr.mxu0 0.0
    %1449 = vmatpush1.msra.mxu0 0.0
    %1450 = vmatprep.subr.mxu0 0.0
    %1451 = vmatpush1.msra.mxu0 0.0
    %1452 = vmatprep.subr.mxu0 0.0
    %1453 = vmatpush1.msra.mxu0 0.0
    %1454 = vmatprep.subr.mxu0 0.0
    %1455 = vmatpush1.msra.mxu0 0.0
    %1456 = vmatprep.subr.mxu0 0.0
    %1457 = vmatpush1.msra.mxu0 0.0
    %1458 = vmatprep.subr.mxu0 0.0
    %1459 = vmatpush1.msra.mxu0 0.0
    %1460 = vmatprep.subr.mxu0 0.0
    %1461 = vmatpush1.msra.mxu0 0.0
    %1462 = vmatprep.subr.mxu0 0.0
    %1463 = vmatpush1.msra.mxu0 0.0
    %1464 = vmatprep.subr.mxu0 0.0
    %1465 = vmatpush1.msra.mxu0 0.0
    %1466 = vmatprep.subr.mxu0 0.0
    %1467 = vmatpush1.msra.mxu0 0.0
    %1468 = vmatprep.subr.mxu0 0.0
    %1469 = vmatpush1.msra.mxu0 0.0
    %1470 = vmatprep.subr.mxu0 0.0
    %1471 = vmatpush1.msra.mxu0 %v1315
    %1472 = vmatprep.subr.mxu0 0.0
    %1473 = vmatpush1.msra.mxu0 %v1314
    %1474 = vmatprep.subr.mxu0 0.0
    %1475 = vmatpush2.msra.mxu0 0.0
    %1476 = vmatprep.subr.mxu0 0.0
    %1477 = vmatpush2.msra.mxu0 0.0
    %1478 = vmatprep.subr.mxu0 0.0
    %1479 = vmatpush2.msra.mxu0 0.0
    %1480 = vmatprep.subr.mxu0 0.0
    %1481 = vmatpush2.msra.mxu0 0.0
    %1482 = vmatprep.subr.mxu0 0.0
    %1483 = vmatpush2.msra.mxu0 0.0
    %1484 = vmatprep.subr.mxu0 0.0
    %1485 = vmatpush2.msra.mxu0 0.0
    %1486 = vmatprep.subr.mxu0 0.0
    %1487 = vmatpush2.msra.mxu0 0.0
    %1488 = vmatprep.subr.mxu0 0.0
    %1489 = vmatpush2.msra.mxu0 0.0
    %1490 = vmatprep.subr.mxu0 0.0
    %1491 = vmatpush2.msra.mxu0 0.0
    %1492 = vmatprep.subr.mxu0 0.0
    %1493 = vmatpush2.msra.mxu0 0.0
    %1494 = vmatprep.subr.mxu0 0.0
    %1495 = vmatpush2.msra.mxu0 0.0
    %1496 = vmatprep.subr.mxu0 0.0
    %1497 = vmatpush2.msra.mxu0 0.0
    %1498 = vmatprep.subr.mxu0 0.0
    %1499 = vmatpush2.msra.mxu0 0.0
    %1500 = vmatprep.subr.mxu0 0.0
    %1501 = vmatpush2.msra.mxu0 0.0
    %1502 = vmatprep.subr.mxu0 0.0
    %1503 = vmatpush2.msra.mxu0 0.0
    %1504 = vmatprep.subr.mxu0 0.0
    %1505 = vmatpush2.msra.mxu0 0.0
    %1506 = vmatprep.mubr.f32.mxu0 0.0
    %1507 = vmatmul.mubr.f32.gmra.mxu0 %v1440
    %v1508 = vpop.f32.mrf.mxu0
    %v1509 = vadd.f32 0.0, %v1508
    %v1510 = vpop.f32.mrf.mxu0
    %1511 = vdwg.mxu0
    %1512 = vst.msk [vmem:[#allocation16] sm:$0xff] %vm151, %v1415
    %1513 = vst [vmem:[#allocation17] sm:$0xff] %v1509
    %v1515 = vcombine.high %v1275, %v1275
    %v1517 = vunpack.c.l.s4 1966171168
    %v1518 = vunpack.c.0.s8 %v1517
    %v1519 = vlaneseq
    %v1520 = vshrl.u32 %v1519, 7
    %v1521 = vsub.s32 %v1518, %v1520
    %v1522 = vrot.slane %v1275, %v1521
    %v1524 = vunpack.c.l.s4 1966171168
    %v1525 = vunpack.c.0.s8 %v1524
    %v1526 = vlaneseq
    %v1527 = vshrl.u32 %v1526, 7
    %v1528 = vsub.s32 %v1525, %v1527
    %v1529 = vrot.slane %v1515, %v1528
    %v1530 = vcombine.high %v1522, %v1522
    %v1531 = vcombine.high %v1529, %v1529
    %v1533 = vunpack.c.l.s4 1966171168
    %v1534 = vunpack.c.0.s8 %v1533
    %v1535 = vlaneseq
    %v1536 = vshrl.u32 %v1535, 7
    %v1537 = vsub.s32 %v1534, %v1536
    %v1538 = vrot.slane %v1522, %v1537
    %v1540 = vunpack.c.l.s4 1966171168
    %v1541 = vunpack.c.0.s8 %v1540
    %v1542 = vlaneseq
    %v1543 = vshrl.u32 %v1542, 7
    %v1544 = vsub.s32 %v1541, %v1543
    %v1545 = vrot.slane %v1529, %v1544
    %v1547 = vunpack.c.l.s4 1966171168
    %v1548 = vunpack.c.0.s8 %v1547
    %v1549 = vlaneseq
    %v1550 = vshrl.u32 %v1549, 7
    %v1551 = vsub.s32 %v1548, %v1550
    %v1552 = vrot.slane %v1530, %v1551
    %v1554 = vunpack.c.l.s4 1966171168
    %v1555 = vunpack.c.0.s8 %v1554
    %v1556 = vlaneseq
    %v1557 = vshrl.u32 %v1556, 7
    %v1558 = vsub.s32 %v1555, %v1557
    %v1559 = vrot.slane %v1531, %v1558
    %v1560 = vcombine.high %v1538, %v1538
    %v1561 = vcombine.high %v1545, %v1545
    %v1562 = vcombine.high %v1552, %v1552
    %v1563 = vcombine.high %v1559, %v1559
    %v1564 = vlaneseq
    %v1565 = vshrl.u32 %v1564, 7
    %v1566 = vsub.s32 0, %v1565
    %v1567 = vrot.slane %v1538, %v1566
    %v1568 = vlaneseq
    %v1569 = vshrl.u32 %v1568, 7
    %v1570 = vsub.s32 0, %v1569
    %v1571 = vrot.slane %v1552, %v1570
    %v1572 = vlaneseq
    %v1573 = vshrl.u32 %v1572, 7
    %v1574 = vsub.s32 0, %v1573
    %v1575 = vrot.slane %v1560, %v1574
    %v1576 = vlaneseq
    %v1577 = vshrl.u32 %v1576, 7
    %v1578 = vsub.s32 0, %v1577
    %v1579 = vrot.slane %v1562, %v1578
    %v1580 = vlaneseq
    %v1581 = vshrl.u32 %v1580, 7
    %v1582 = vsub.s32 0, %v1581
    %v1583 = vrot.slane %v1545, %v1582
    %v1584 = vlaneseq
    %v1585 = vshrl.u32 %v1584, 7
    %v1586 = vsub.s32 0, %v1585
    %v1587 = vrot.slane %v1559, %v1586
    %v1588 = vlaneseq
    %v1589 = vshrl.u32 %v1588, 7
    %v1590 = vsub.s32 0, %v1589
    %v1591 = vrot.slane %v1561, %v1590
    %v1592 = vlaneseq
    %v1593 = vshrl.u32 %v1592, 7
    %v1594 = vsub.s32 0, %v1593
    %v1595 = vrot.slane %v1563, %v1594
    %v1604 = vadd.f32 %v674, %v1567
    %v1605 = vadd.f32 %v679, %v1571
    %v1606 = vadd.f32 %v684, %v1575
    %v1607 = vadd.f32 %v689, %v1579
    %v1608 = vadd.f32 %v694, %v1583
    %v1609 = vadd.f32 %v699, %v1587
    %v1610 = vadd.f32 %v704, %v1591
    %v1611 = vadd.f32 %v709, %v1595
    %v1613 = vcombine.high %v1509, %v1509
    %v1615 = vunpack.c.l.s4 1966171168
    %v1616 = vunpack.c.0.s8 %v1615
    %v1617 = vlaneseq
    %v1618 = vshrl.u32 %v1617, 7
    %v1619 = vsub.s32 %v1616, %v1618
    %v1620 = vrot.slane %v1509, %v1619
    %v1622 = vunpack.c.l.s4 1966171168
    %v1623 = vunpack.c.0.s8 %v1622
    %v1624 = vlaneseq
    %v1625 = vshrl.u32 %v1624, 7
    %v1626 = vsub.s32 %v1623, %v1625
    %v1627 = vrot.slane %v1613, %v1626
    %v1628 = vcombine.high %v1620, %v1620
    %v1629 = vcombine.high %v1627, %v1627
    %v1631 = vunpack.c.l.s4 1966171168
    %v1632 = vunpack.c.0.s8 %v1631
    %v1633 = vlaneseq
    %v1634 = vshrl.u32 %v1633, 7
    %v1635 = vsub.s32 %v1632, %v1634
    %v1636 = vrot.slane %v1620, %v1635
    %v1638 = vunpack.c.l.s4 1966171168
    %v1639 = vunpack.c.0.s8 %v1638
    %v1640 = vlaneseq
    %v1641 = vshrl.u32 %v1640, 7
    %v1642 = vsub.s32 %v1639, %v1641
    %v1643 = vrot.slane %v1627, %v1642
    %v1645 = vunpack.c.l.s4 1966171168
    %v1646 = vunpack.c.0.s8 %v1645
    %v1647 = vlaneseq
    %v1648 = vshrl.u32 %v1647, 7
    %v1649 = vsub.s32 %v1646, %v1648
    %v1650 = vrot.slane %v1628, %v1649
    %v1652 = vunpack.c.l.s4 1966171168
    %v1653 = vunpack.c.0.s8 %v1652
    %v1654 = vlaneseq
    %v1655 = vshrl.u32 %v1654, 7
    %v1656 = vsub.s32 %v1653, %v1655
    %v1657 = vrot.slane %v1629, %v1656
    %v1658 = vcombine.high %v1636, %v1636
    %v1659 = vcombine.high %v1643, %v1643
    %v1660 = vcombine.high %v1650, %v1650
    %v1661 = vcombine.high %v1657, %v1657
    %v1662 = vlaneseq
    %v1663 = vshrl.u32 %v1662, 7
    %v1664 = vsub.s32 0, %v1663
    %v1665 = vrot.slane %v1636, %v1664
    %v1666 = vlaneseq
    %v1667 = vshrl.u32 %v1666, 7
    %v1668 = vsub.s32 0, %v1667
    %v1669 = vrot.slane %v1650, %v1668
    %v1670 = vlaneseq
    %v1671 = vshrl.u32 %v1670, 7
    %v1672 = vsub.s32 0, %v1671
    %v1673 = vrot.slane %v1658, %v1672
    %v1674 = vlaneseq
    %v1675 = vshrl.u32 %v1674, 7
    %v1676 = vsub.s32 0, %v1675
    %v1677 = vrot.slane %v1660, %v1676
    %v1678 = vlaneseq
    %v1679 = vshrl.u32 %v1678, 7
    %v1680 = vsub.s32 0, %v1679
    %v1681 = vrot.slane %v1643, %v1680
    %v1682 = vlaneseq
    %v1683 = vshrl.u32 %v1682, 7
    %v1684 = vsub.s32 0, %v1683
    %v1685 = vrot.slane %v1657, %v1684
    %v1686 = vlaneseq
    %v1687 = vshrl.u32 %v1686, 7
    %v1688 = vsub.s32 0, %v1687
    %v1689 = vrot.slane %v1659, %v1688
    %v1690 = vlaneseq
    %v1691 = vshrl.u32 %v1690, 7
    %v1692 = vsub.s32 0, %v1691
    %v1693 = vrot.slane %v1661, %v1692
    %v1702 = vadd.f32 %v1604, %v1665
    %v1703 = vadd.f32 %v1605, %v1669
    %v1704 = vadd.f32 %v1606, %v1673
    %v1705 = vadd.f32 %v1607, %v1677
    %v1706 = vadd.f32 %v1608, %v1681
    %v1707 = vadd.f32 %v1609, %v1685
    %v1708 = vadd.f32 %v1610, %v1689
    %v1709 = vadd.f32 %v1611, %v1693
    %v1710 = vld [vmem:[#allocation11] sm:$0xff]
    %v1711 = vld [vmem:[#allocation11 + $0x8] sm:$0xff]
    %v1712 = vld [vmem:[#allocation11 + $0x10] sm:$0xff]
    %v1713 = vld [vmem:[#allocation11 + $0x18] sm:$0xff]
    %v1714 = vld [vmem:[#allocation11 + $0x20] sm:$0xff]
    %v1715 = vld [vmem:[#allocation11 + $0x28] sm:$0xff]
    %v1716 = vld [vmem:[#allocation11 + $0x30] sm:$0xff]
    %v1717 = vld [vmem:[#allocation11 + $0x38] sm:$0xff]
    %v1718 = vld [vmem:[#allocation11 + $0x40] sm:$0xff]
    %v1719 = vld [vmem:[#allocation11 + $0x48] sm:$0xff]
    %v1720 = vld [vmem:[#allocation11 + $0x50] sm:$0xff]
    %v1721 = vld [vmem:[#allocation11 + $0x58] sm:$0xff]
    %v1722 = vld [vmem:[#allocation11 + $0x60] sm:$0xff]
    %v1723 = vld [vmem:[#allocation11 + $0x68] sm:$0xff]
    %v1724 = vld [vmem:[#allocation11 + $0x70] sm:$0xff]
    %v1725 = vld [vmem:[#allocation11 + $0x78] sm:$0xff]
    %1726 = vmatprep.subr.mxu0 0.0
    %1727 = vmatpush1.msra.mxu0 %v1725
    %1728 = vmatprep.subr.mxu0 0.0
    %1729 = vmatpush1.msra.mxu0 %v1724
    %1730 = vmatprep.subr.mxu0 0.0
    %1731 = vmatpush1.msra.mxu0 %v1723
    %1732 = vmatprep.subr.mxu0 0.0
    %1733 = vmatpush1.msra.mxu0 %v1722
    %1734 = vmatprep.subr.mxu0 0.0
    %1735 = vmatpush1.msra.mxu0 %v1721
    %1736 = vmatprep.subr.mxu0 0.0
    %1737 = vmatpush1.msra.mxu0 %v1720
    %1738 = vmatprep.subr.mxu0 0.0
    %1739 = vmatpush1.msra.mxu0 %v1719
    %1740 = vmatprep.subr.mxu0 0.0
    %1741 = vmatpush1.msra.mxu0 %v1718
    %1742 = vmatprep.subr.mxu0 0.0
    %1743 = vmatpush1.msra.mxu0 %v1717
    %1744 = vmatprep.subr.mxu0 0.0
    %1745 = vmatpush1.msra.mxu0 %v1716
    %1746 = vmatprep.subr.mxu0 0.0
    %1747 = vmatpush1.msra.mxu0 %v1715
    %1748 = vmatprep.subr.mxu0 0.0
    %1749 = vmatpush1.msra.mxu0 %v1714
    %1750 = vmatprep.subr.mxu0 0.0
    %1751 = vmatpush1.msra.mxu0 %v1713
    %1752 = vmatprep.subr.mxu0 0.0
    %1753 = vmatpush1.msra.mxu0 %v1712
    %1754 = vmatprep.subr.mxu0 0.0
    %1755 = vmatpush1.msra.mxu0 %v1711
    %1756 = vmatprep.subr.mxu0 0.0
    %1757 = vmatpush1.msra.mxu0 %v1710
    %1758 = vmatprep.subr.mxu0 0.0
    %1759 = vmatpush2.msra.mxu0 0.0
    %1760 = vmatprep.subr.mxu0 0.0
    %1761 = vmatpush2.msra.mxu0 0.0
    %1762 = vmatprep.subr.mxu0 0.0
    %1763 = vmatpush2.msra.mxu0 0.0
    %1764 = vmatprep.subr.mxu0 0.0
    %1765 = vmatpush2.msra.mxu0 0.0
    %1766 = vmatprep.subr.mxu0 0.0
    %1767 = vmatpush2.msra.mxu0 0.0
    %1768 = vmatprep.subr.mxu0 0.0
    %1769 = vmatpush2.msra.mxu0 0.0
    %1770 = vmatprep.subr.mxu0 0.0
    %1771 = vmatpush2.msra.mxu0 0.0
    %1772 = vmatprep.subr.mxu0 0.0
    %1773 = vmatpush2.msra.mxu0 0.0
    %1774 = vmatprep.subr.mxu0 0.0
    %1775 = vmatpush2.msra.mxu0 0.0
    %1776 = vmatprep.subr.mxu0 0.0
    %1777 = vmatpush2.msra.mxu0 0.0
    %1778 = vmatprep.subr.mxu0 0.0
    %1779 = vmatpush2.msra.mxu0 0.0
    %1780 = vmatprep.subr.mxu0 0.0
    %1781 = vmatpush2.msra.mxu0 0.0
    %1782 = vmatprep.subr.mxu0 0.0
    %1783 = vmatpush2.msra.mxu0 0.0
    %1784 = vmatprep.subr.mxu0 0.0
    %1785 = vmatpush2.msra.mxu0 0.0
    %1786 = vmatprep.subr.mxu0 0.0
    %1787 = vmatpush2.msra.mxu0 0.0
    %1788 = vmatprep.subr.mxu0 0.0
    %1789 = vmatpush2.msra.mxu0 0.0
    %1790 = vmatprep.mubr.f32.mxu0 0.0
    %1791 = vmatmul.mubr.f32.gmra.mxu0 %v1702
    %v1792 = vpop.f32.mrf.mxu0
    %v1793 = vadd.f32 0.0, %v1792
    %v1794 = vpop.f32.mrf.mxu0
    %1795 = vmatprep.mubr.f32.mxu0 0.0
    %1796 = vmatmul.mubr.f32.gmra.mxu0 %v1703
    %v1797 = vpop.f32.mrf.mxu0
    %v1798 = vadd.f32 0.0, %v1797
    %v1799 = vpop.f32.mrf.mxu0
    %1800 = vmatprep.mubr.f32.mxu0 0.0
    %1801 = vmatmul.mubr.f32.gmra.mxu0 %v1704
    %v1802 = vpop.f32.mrf.mxu0
    %v1803 = vadd.f32 0.0, %v1802
    %v1804 = vpop.f32.mrf.mxu0
    %1805 = vmatprep.mubr.f32.mxu0 0.0
    %1806 = vmatmul.mubr.f32.gmra.mxu0 %v1705
    %v1807 = vpop.f32.mrf.mxu0
    %v1808 = vadd.f32 0.0, %v1807
    %v1809 = vpop.f32.mrf.mxu0
    %1810 = vmatprep.mubr.f32.mxu0 0.0
    %1811 = vmatmul.mubr.f32.gmra.mxu0 %v1706
    %v1812 = vpop.f32.mrf.mxu0
    %v1813 = vadd.f32 0.0, %v1812
    %v1814 = vpop.f32.mrf.mxu0
    %1815 = vmatprep.mubr.f32.mxu0 0.0
    %1816 = vmatmul.mubr.f32.gmra.mxu0 %v1707
    %v1817 = vpop.f32.mrf.mxu0
    %v1818 = vadd.f32 0.0, %v1817
    %v1819 = vpop.f32.mrf.mxu0
    %1820 = vmatprep.mubr.f32.mxu0 0.0
    %1821 = vmatmul.mubr.f32.gmra.mxu0 %v1708
    %v1822 = vpop.f32.mrf.mxu0
    %v1823 = vadd.f32 0.0, %v1822
    %v1824 = vpop.f32.mrf.mxu0
    %1825 = vmatprep.mubr.f32.mxu0 0.0
    %1826 = vmatmul.mubr.f32.gmra.mxu0 %v1709
    %v1827 = vpop.f32.mrf.mxu0
    %v1828 = vadd.f32 0.0, %v1827
    %v1829 = vpop.f32.mrf.mxu0
    %1830 = vdwg.mxu0
    %1831 = vst [vmem:[#allocation19] sm:$0xff] %v1793
    %1832 = vst [vmem:[#allocation19 + $0x8] sm:$0xff] %v1798
    %1833 = vst [vmem:[#allocation19 + $0x10] sm:$0xff] %v1803
    %1834 = vst [vmem:[#allocation19 + $0x18] sm:$0xff] %v1808
    %1835 = vst [vmem:[#allocation19 + $0x20] sm:$0xff] %v1813
    %1836 = vst [vmem:[#allocation19 + $0x28] sm:$0xff] %v1818
    %1837 = vst [vmem:[#allocation19 + $0x30] sm:$0xff] %v1823
    %1838 = vst [vmem:[#allocation19 + $0x38] sm:$0xff] %v1828
    %1839 = vmax.xlane.f32.xlu0 %v1793
    %v1840 = vpop.xlane.xlu0 %1839
    %1841 = vmax.xlane.f32.xlu0 %v1798
    %v1842 = vpop.xlane.xlu0 %1841
    %1843 = vmax.xlane.f32.xlu0 %v1803
    %v1844 = vpop.xlane.xlu0 %1843
    %1845 = vmax.xlane.f32.xlu0 %v1808
    %v1846 = vpop.xlane.xlu0 %1845
    %1847 = vmax.xlane.f32.xlu0 %v1813
    %v1848 = vpop.xlane.xlu0 %1847
    %1849 = vmax.xlane.f32.xlu0 %v1818
    %v1850 = vpop.xlane.xlu0 %1849
    %1851 = vmax.xlane.f32.xlu0 %v1823
    %v1852 = vpop.xlane.xlu0 %1851
    %1853 = vmax.xlane.f32.xlu0 %v1828
    %v1854 = vpop.xlane.xlu0 %1853
    %v1855 = vsub.f32 %v1793, %v1840
    %v1856 = vsub.f32 %v1798, %v1842
    %v1857 = vsub.f32 %v1803, %v1844
    %v1858 = vsub.f32 %v1808, %v1846
    %v1859 = vsub.f32 %v1813, %v1848
    %v1860 = vsub.f32 %v1818, %v1850
    %v1861 = vsub.f32 %v1823, %v1852
    %v1862 = vsub.f32 %v1828, %v1854
    %v1863 = vmul.f32 %v1855, 1.442695
    %v1864 = vpow.pop %v1863
    %v1865 = vmul.f32 %v1856, 1.442695
    %v1866 = vpow.pop %v1865
    %v1867 = vmul.f32 %v1857, 1.442695
    %v1868 = vpow.pop %v1867
    %v1869 = vmul.f32 %v1858, 1.442695
    %v1870 = vpow.pop %v1869
    %v1871 = vmul.f32 %v1859, 1.442695
    %v1872 = vpow.pop %v1871
    %v1873 = vmul.f32 %v1860, 1.442695
    %v1874 = vpow.pop %v1873
    %v1875 = vmul.f32 %v1861, 1.442695
    %v1876 = vpow.pop %v1875
    %v1877 = vmul.f32 %v1862, 1.442695
    %v1878 = vpow.pop %v1877
    %1879 = vadd.xlane.f32.xlu0 %v1864
    %v1880 = vpop.xlane.xlu0 %1879
    %1881 = vadd.xlane.f32.xlu0 %v1866
    %v1882 = vpop.xlane.xlu0 %1881
    %1883 = vadd.xlane.f32.xlu0 %v1868
    %v1884 = vpop.xlane.xlu0 %1883
    %1885 = vadd.xlane.f32.xlu0 %v1870
    %v1886 = vpop.xlane.xlu0 %1885
    %1887 = vadd.xlane.f32.xlu0 %v1872
    %v1888 = vpop.xlane.xlu0 %1887
    %1889 = vadd.xlane.f32.xlu0 %v1874
    %v1890 = vpop.xlane.xlu0 %1889
    %1891 = vadd.xlane.f32.xlu0 %v1876
    %v1892 = vpop.xlane.xlu0 %1891
    %1893 = vadd.xlane.f32.xlu0 %v1878
    %v1894 = vpop.xlane.xlu0 %1893
    %v1895 = vlog2.pop %v1880
    %v1896 = vmul.f32 %v1895, 0.6931472
    %v1897 = vlog2.pop %v1882
    %v1898 = vmul.f32 %v1897, 0.6931472
    %v1899 = vlog2.pop %v1884
    %v1900 = vmul.f32 %v1899, 0.6931472
    %v1901 = vlog2.pop %v1886
    %v1902 = vmul.f32 %v1901, 0.6931472
    %v1903 = vlog2.pop %v1888
    %v1904 = vmul.f32 %v1903, 0.6931472
    %v1905 = vlog2.pop %v1890
    %v1906 = vmul.f32 %v1905, 0.6931472
    %v1907 = vlog2.pop %v1892
    %v1908 = vmul.f32 %v1907, 0.6931472
    %v1909 = vlog2.pop %v1894
    %v1910 = vmul.f32 %v1909, 0.6931472
    %v1911 = vadd.f32 %v1840, %v1896
    %v1912 = vadd.f32 %v1842, %v1898
    %v1913 = vadd.f32 %v1844, %v1900
    %v1914 = vadd.f32 %v1846, %v1902
    %v1915 = vadd.f32 %v1848, %v1904
    %v1916 = vadd.f32 %v1850, %v1906
    %v1917 = vadd.f32 %v1852, %v1908
    %v1918 = vadd.f32 %v1854, %v1910
    %v1919 = vmul.f32 %v1793, %v583
    %v1920 = vmul.f32 %v1798, %v584
    %v1921 = vmul.f32 %v1803, %v585
    %v1922 = vmul.f32 %v1808, %v586
    %v1923 = vmul.f32 %v1813, %v587
    %v1924 = vmul.f32 %v1818, %v588
    %v1925 = vmul.f32 %v1823, %v589
    %v1926 = vmul.f32 %v1828, %v590
    %1927 = vadd.xlane.f32.xlu0 %v1919
    %v1928 = vpop.xlane.xlu0 %1927
    %1929 = vadd.xlane.f32.xlu0 %v1920
    %v1930 = vpop.xlane.xlu0 %1929
    %1931 = vadd.xlane.f32.xlu0 %v1921
    %v1932 = vpop.xlane.xlu0 %1931
    %1933 = vadd.xlane.f32.xlu0 %v1922
    %v1934 = vpop.xlane.xlu0 %1933
    %1935 = vadd.xlane.f32.xlu0 %v1923
    %v1936 = vpop.xlane.xlu0 %1935
    %1937 = vadd.xlane.f32.xlu0 %v1924
    %v1938 = vpop.xlane.xlu0 %1937
    %1939 = vadd.xlane.f32.xlu0 %v1925
    %v1940 = vpop.xlane.xlu0 %1939
    %1941 = vadd.xlane.f32.xlu0 %v1926
    %v1942 = vpop.xlane.xlu0 %1941
    %v1943 = vsub.f32 %v1911, %v1928
    %v1944 = vsub.f32 %v1912, %v1930
    %v1945 = vsub.f32 %v1913, %v1932
    %v1946 = vsub.f32 %v1914, %v1934
    %v1947 = vsub.f32 %v1915, %v1936
    %v1948 = vsub.f32 %v1916, %v1938
    %v1949 = vsub.f32 %v1917, %v1940
    %v1950 = vsub.f32 %v1918, %v1942
    %v1951 = vld [vmem:[%s3] sm:$0xff]
    %v1952 = vld [vmem:[%s3 + $0x8] sm:$0xff]
    %v1953 = vld [vmem:[%s3 + $0x10] sm:$0xff]
    %v1954 = vld [vmem:[%s3 + $0x18] sm:$0xff]
    %v1955 = vld [vmem:[%s3 + $0x20] sm:$0xff]
    %v1956 = vld [vmem:[%s3 + $0x28] sm:$0xff]
    %v1957 = vld [vmem:[%s3 + $0x30] sm:$0xff]
    %v1958 = vld [vmem:[%s3 + $0x38] sm:$0xff]
    %v1959 = vmul.f32 %v1943, %v1951
    %v1960 = vmul.f32 %v1944, %v1952
    %v1961 = vmul.f32 %v1945, %v1953
    %v1962 = vmul.f32 %v1946, %v1954
    %v1963 = vmul.f32 %v1947, %v1955
    %v1964 = vmul.f32 %v1948, %v1956
    %v1965 = vmul.f32 %v1949, %v1957
    %v1966 = vmul.f32 %v1950, %v1958
    %vm1967 = vcmask 7168
    %v1968 = vsel %vm1967, %v1959, 0.0
    %v1969 = vsel %vm1967, %v1960, 0.0
    %v1970 = vadd.f32 %v1968, %v1969
    %v1971 = vsel %vm1967, %v1961, 0.0
    %v1972 = vadd.f32 %v1970, %v1971
    %v1973 = vsel %vm1967, %v1962, 0.0
    %v1974 = vadd.f32 %v1972, %v1973
    %v1975 = vsel %vm1967, %v1963, 0.0
    %v1976 = vadd.f32 %v1974, %v1975
    %v1977 = vsel %vm1967, %v1964, 0.0
    %v1978 = vadd.f32 %v1976, %v1977
    %v1979 = vsel %vm1967, %v1965, 0.0
    %v1980 = vadd.f32 %v1978, %v1979
    %v1981 = vsel %vm1967, %v1966, 0.0
    %v1982 = vadd.f32 %v1980, %v1981
    %v1983 = vrot.slane %v1982, 4
    %v1984 = vadd.f32 %v1982, %v1983
    %v1985 = vrot.slane %v1984, 2
    %v1986 = vadd.f32 %v1984, %v1985
    %v1987 = vrot.slane %v1986, 1
    %v1988 = vadd.f32 %v1986, %v1987
    %v1989 = vsel %vm1967, %v1951, 0.0
    %v1990 = vsel %vm1967, %v1952, 0.0
    %v1991 = vadd.f32 %v1989, %v1990
    %v1992 = vsel %vm1967, %v1953, 0.0
    %v1993 = vadd.f32 %v1991, %v1992
    %v1994 = vsel %vm1967, %v1954, 0.0
    %v1995 = vadd.f32 %v1993, %v1994
    %v1996 = vsel %vm1967, %v1955, 0.0
    %v1997 = vadd.f32 %v1995, %v1996
    %v1998 = vsel %vm1967, %v1956, 0.0
    %v1999 = vadd.f32 %v1997, %v1998
    %v2000 = vsel %vm1967, %v1957, 0.0
    %v2001 = vadd.f32 %v1999, %v2000
    %v2002 = vsel %vm1967, %v1958, 0.0
    %v2003 = vadd.f32 %v2001, %v2002
    %v2004 = vrot.slane %v2003, 4
    %v2005 = vadd.f32 %v2003, %v2004
    %v2006 = vrot.slane %v2005, 2
    %v2007 = vadd.f32 %v2005, %v2006
    %v2008 = vrot.slane %v2007, 1
    %v2009 = vadd.f32 %v2007, %v2008
    %v2010 = vmax.f32 %v2009, 1.0
    %v2011 = vrcp.pop %v2010
    %v2012 = vmul.f32 %v1988, %v2011
    %2013 = vst.msk [vmem:[#allocation22] sm:$0x1] %vm1312, %v2012
    // Predicated region
    $region90: #{fix_model_forward.1} parent=1 // pred_check
      _
    $region91: #{fix_model_forward.1} parent=1 // pred_check_branch
      %2015 = sbr.rel (0) target = $region93
    $region92: #{fix_model_forward.1} parent=1 // pred_region
      %s2017 = ssub.s32 256, 256
      %2018 = vsyncadd [#allocation4], %s2017
      %s2019 = sshll.u32 [#allocation13], 4
      %s2020 = int_to_ptr.vmem [resolvable:$true] %s2019
      %2025 = dma.vmem_to_hbm [thread:$0]  %s2020, 256, %s16, [#allocation4], 128, 128, 8
    $region93: #{fix_model_forward.1} parent=1 // pred_fallthru
      _
    // Predicated region
    $region94: #{fix_model_forward.1} parent=1 // pred_check
      _
    $region95: #{fix_model_forward.1} parent=1 // pred_check_branch
      %2027 = sbr.rel (0) target = $region97
    $region96: #{fix_model_forward.1} parent=1 // pred_region
      _
    $region97: #{fix_model_forward.1} parent=1 // pred_fallthru
      _
    // Predicated region
    $region98: #{fix_model_forward.1} parent=1 // pred_check
      _
    $region99: #{fix_model_forward.1} parent=1 // pred_check_branch
      %2029 = sbr.rel (0) target = $region101
    $region100: #{fix_model_forward.1} parent=1 // pred_region
      %s2031 = ssub.s32 128, 128
      %2032 = vsyncadd [#allocation15], %s2031
      %s2034 = sshll.u32 [#allocation14], 4
      %s2035 = int_to_ptr.vmem [resolvable:$true] %s2034
      %2037 = dma.vmem_to_hbm [thread:$0]  %s2035, 128, %s18, [#allocation15]
    $region101: #{fix_model_forward.1} parent=1 // pred_fallthru
      _
    // Predicated region
    $region102: #{fix_model_forward.1} parent=1 // pred_check
      _
    $region103: #{fix_model_forward.1} parent=1 // pred_check_branch
      %2039 = sbr.rel (0) target = $region105
    $region104: #{fix_model_forward.1} parent=1 // pred_region
      %s2041 = ssub.s32 128, 128
      %2042 = vsyncadd [#allocation15], %s2041
      %s2044 = sshll.u32 [#allocation16], 4
      %s2045 = int_to_ptr.vmem [resolvable:$true] %s2044
      %2047 = dma.vmem_to_hbm [thread:$0]  %s2045, 128, %s19, [#allocation15]
    $region105: #{fix_model_forward.1} parent=1 // pred_fallthru
      _
    // Predicated region
    $region106: #{fix_model_forward.1} parent=1 // pred_check
      _
    $region107: #{fix_model_forward.1} parent=1 // pred_check_branch
      %2049 = sbr.rel (0) target = $region109
    $region108: #{fix_model_forward.1} parent=1 // pred_region
      %s2051 = ssub.s32 128, 128
      %2052 = vsyncadd [#allocation18], %s2051
      %s2054 = sshll.u32 [#allocation17], 4
      %s2055 = int_to_ptr.vmem [resolvable:$true] %s2054
      %2057 = dma.vmem_to_hbm [thread:$0]  %s2055, 128, %s20, [#allocation18]
    $region109: #{fix_model_forward.1} parent=1 // pred_fallthru
      _
    // Predicated region
    $region110: #{fix_model_forward.1} parent=1 // pred_check
      _
    $region111: #{fix_model_forward.1} parent=1 // pred_check_branch
      %2059 = sbr.rel (0) target = $region113
    $region112: #{fix_model_forward.1} parent=1 // pred_region
      %s2061 = ssub.s32 1024, 1024
      %2062 = vsyncadd [#allocation18], %s2061
      %s2063 = sshll.u32 [#allocation19], 4
      %s2064 = int_to_ptr.vmem [resolvable:$true] %s2063
      %2069 = dma.vmem_to_hbm [thread:$0]  %s2064, 1024, %s21, [#allocation18], 128, 128, 8
    $region113: #{fix_model_forward.1} parent=1 // pred_fallthru
      _
    // Predicated region
    $region114: #{fix_model_forward.1} parent=1 // pred_check
      _
    $region115: #{fix_model_forward.1} parent=1 // pred_check_branch
      %2071 = sbr.rel (0) target = $region117
    $region116: #{fix_model_forward.1} parent=1 // pred_region
      %s2073 = ssub.s32 16, 16
      %2074 = vsyncadd [#allocation21], %s2073
      %s2076 = sshll.u32 [#allocation20], 4
      %s2077 = int_to_ptr.vmem [resolvable:$true] %s2076
      %2079 = dma.vmem_to_hbm [thread:$0]  %s2077, 16, %s22, [#allocation21]
    $region117: #{fix_model_forward.1} parent=1 // pred_fallthru
      _
    // Predicated region
    $region118: #{fix_model_forward.1} parent=1 // pred_check
      _
    $region119: #{fix_model_forward.1} parent=1 // pred_check_branch
      %2081 = sbr.rel (0) target = $region121
    $region120: #{fix_model_forward.1} parent=1 // pred_region
      %s2083 = ssub.s32 16, 16
      %2084 = vsyncadd [#allocation21], %s2083
      %s2086 = sshll.u32 [#allocation22], 4
      %s2087 = int_to_ptr.vmem [resolvable:$true] %s2086
      %2089 = dma.vmem_to_hbm [thread:$0]  %s2087, 16, %s23, [#allocation21]
    $region121: #{fix_model_forward.1} parent=1 // pred_fallthru
      _
    // Predicated region
    $region122: #{fix_model_forward.1} parent=1 // pred_check
      _
    $region123: #{fix_model_forward.1} parent=1 // pred_check_branch
      %2091 = sbr.rel (0) target = $region125
    $region124: #{fix_model_forward.1} parent=1 // pred_region
      %2092 = dma.done [#allocation4], 256
    $region125: #{fix_model_forward.1} parent=1 // pred_fallthru
      _
    // Predicated region
    $region126: #{fix_model_forward.1} parent=1 // pred_check
      _
    $region127: #{fix_model_forward.1} parent=1 // pred_check_branch
      %2094 = sbr.rel (0) target = $region129
    $region128: #{fix_model_forward.1} parent=1 // pred_region
      _
    $region129: #{fix_model_forward.1} parent=1 // pred_fallthru
      _
    // Predicated region
    $region130: #{fix_model_forward.1} parent=1 // pred_check
      _
    $region131: #{fix_model_forward.1} parent=1 // pred_check_branch
      %2096 = sbr.rel (0) target = $region133
    $region132: #{fix_model_forward.1} parent=1 // pred_region
      %2097 = dma.done [#allocation15], 128
    $region133: #{fix_model_forward.1} parent=1 // pred_fallthru
      _
    // Predicated region
    $region134: #{fix_model_forward.1} parent=1 // pred_check
      _
    $region135: #{fix_model_forward.1} parent=1 // pred_check_branch
      %2099 = sbr.rel (0) target = $region137
    $region136: #{fix_model_forward.1} parent=1 // pred_region
      %2100 = dma.done [#allocation15], 128
    $region137: #{fix_model_forward.1} parent=1 // pred_fallthru
      _
    // Predicated region
    $region138: #{fix_model_forward.1} parent=1 // pred_check
      _
    $region139: #{fix_model_forward.1} parent=1 // pred_check_branch
      %2102 = sbr.rel (0) target = $region141
    $region140: #{fix_model_forward.1} parent=1 // pred_region
      %2103 = dma.done [#allocation18], 128
    $region141: #{fix_model_forward.1} parent=1 // pred_fallthru
      _
    // Predicated region
    $region142: #{fix_model_forward.1} parent=1 // pred_check
      _
    $region143: #{fix_model_forward.1} parent=1 // pred_check_branch
      %2105 = sbr.rel (0) target = $region145
    $region144: #{fix_model_forward.1} parent=1 // pred_region
      %2106 = dma.done [#allocation18], 1024
    $region145: #{fix_model_forward.1} parent=1 // pred_fallthru
      _
    // Predicated region
    $region146: #{fix_model_forward.1} parent=1 // pred_check
      _
    $region147: #{fix_model_forward.1} parent=1 // pred_check_branch
      %2108 = sbr.rel (0) target = $region149
    $region148: #{fix_model_forward.1} parent=1 // pred_region
      %2109 = dma.done [#allocation21], 16
    $region149: #{fix_model_forward.1} parent=1 // pred_fallthru
      _
    // Predicated region
    $region150: #{fix_model_forward.1} parent=1 // pred_check
      _
    $region151: #{fix_model_forward.1} parent=1 // pred_check_branch
      %2111 = sbr.rel (0) target = $region153
    $region152: #{fix_model_forward.1} parent=1 // pred_region
      %2112 = dma.done [#allocation21], 16
    $region153: #{fix_model_forward.1} parent=1 // pred_fallthru
      _
    %2113 = vsyncpa [#allocation3], 1
    %2114 = vsyncpa [#allocation6], 1
    %2115 = vsyncpa [#allocation9], 1
    %2116 = vsyncpa [#allocation12], 1
    %2117 = vsyncpa [#allocation4], 1
    %2118 = vsyncpa [#allocation15], 1
    %2119 = vsyncpa [#allocation18], 1
    %2120 = vsyncpa [#allocation21], 1

</llo_original>
